<compile_context>
chip_gen: v7x
topology: tpu7x:2x2x1
jax: 0.10.0
libtpu: 0.0.40
codegen_flags: <defaults>
</compile_context>

<pallas_src>
import math
import jax
import jax.numpy as jnp
from jax import lax
from jax.experimental import pallas as pl
from jax.experimental.pallas import tpu as pltpu


def make_digrac_kernel(hop: int, hidden: int, z_pad_cols: int):
    H = hidden
    ZP = z_pad_cols

    def kernel(feat_ref, abar_hbm, inv_ds_ref, inv_dt_ref,
               w0_ref, w1_ref, wp_ref, bias_ref,
               hop_s_ref, hop_t_ref,
               z_out_ref, logp_ref,
               abar_vmem, copy_sem):
        f32 = jnp.float32
        bf16 = jnp.bfloat16

        # --- start the A_bar HBM->VMEM DMA; it overlaps the fused MLP below ---
        abar_copy = pltpu.make_async_copy(abar_hbm, abar_vmem, copy_sem)
        abar_copy.start()

        feats = feat_ref[...]           # (N, F)
        inv_ds = inv_ds_ref[...]        # (1, N)  1 / out-degree
        inv_dt = inv_dt_ref[...]        # (1, N)  1 / in-degree

        # --- fused source/target MLPs ---
        # layer-1 weight = [w_s0 | w_t0]; layer-2 weight = blockdiag(w_s1, w_t1)
        # TODO(synk): dropout omitted (eval-mode forward, identity).
        x = jnp.maximum(jnp.dot(feats, w0_ref[...], preferred_element_type=f32), 0.0)
        x = jnp.dot(x, w1_ref[...], preferred_element_type=f32)      # (N, 2H)
        x_T = x.T                                                    # (2H, N)
        curr_s = x_T[:H, :]                                          # (H, N)
        curr_t = x_T[H:, :]                                          # (H, N)

        feat_s = hop_s_ref[0] * curr_s                               # f32 accumulators
        feat_t = hop_t_ref[0] * curr_t

        # --- DIMPA multi-hop aggregation; D^-1 folded into the (H, N) states ---
        abar_copy.wait()
        abar = abar_vmem[...]                                        # (N, N) bf16

        dn_nt = (((1,), (1,)), ((), ()))   # lhs @ rhs^T   (attention-score pattern)
        dn_nn = (((1,), (0,)), ((), ()))   # lhs @ rhs
        for h in range(1, hop + 1):
            # source: (D_out^-1 A curr_s)^T == (curr_s^T @ A^T) * inv_ds
            curr_s = lax.dot_general(curr_s.astype(bf16), abar, dn_nt,
                                     preferred_element_type=f32) * inv_ds
            # target: (D_in^-1 A^T curr_t)^T == (curr_t^T @ A) * inv_dt
            curr_t = lax.dot_general(curr_t.astype(bf16), abar, dn_nn,
                                     preferred_element_type=f32) * inv_dt
            feat_s = feat_s + hop_s_ref[h] * curr_s
            feat_t = feat_t + hop_t_ref[h] * curr_t

        z_T = jnp.concatenate([feat_s, feat_t], axis=0)              # (2H, N)
        z = z_T.T                                                    # (N, 2H)

        # --- lane-padded cluster head (pad bias = -1e30 -> exp == 0 exactly) ---
        logits = jnp.dot(z, wp_ref[...], preferred_element_type=f32) + bias_ref[...]
        mx = jnp.max(logits, axis=1, keepdims=True)
        shifted = logits - mx
        s = jnp.sum(jnp.exp(shifted), axis=1, keepdims=True)
        logp_ref[...] = shifted - jnp.log(s)                         # (N, CP) full-lane store

        # --- F.normalize(z, p=2, dim=1), emitted lane-padded; rsqrt on the EUP ---
        nrm_sq = jnp.sum(z * z, axis=1, keepdims=True)
        z_n = z * lax.rsqrt(jnp.maximum(nrm_sq, 1e-24))
        pad = ZP - 2 * H
        if pad > 0:
            z_n = jnp.concatenate(
                [z_n, jnp.zeros((z_n.shape[0], pad), f32)], axis=1)
        z_out_ref[...] = z_n                                         # (N, ZP) full-lane store

    return kernel


def digrac_forward(edge_index, edge_weight, features, params, hop, fill_value):
    N, F_ = features.shape
    H = params["w_s1"].shape[0]
    C = params["W_prob"].shape[1]
    CP = 128 * ((C + 127) // 128)          # lane-padded cluster width
    ZP = 128 * ((2 * H + 127) // 128)      # lane-padded embedding width

    # --- glue: dense adjacency from edge list + "remaining" self loops ---
    src, dst = edge_index[0], edge_index[1]
    A = jnp.zeros((N, N), jnp.float32).at[src, dst].add(edge_weight)
    diag = jnp.diagonal(A)
    A_bar = A + jnp.diag(jnp.where(diag == 0.0, fill_value, 0.0))

    # degree reciprocals precomputed outside the kernel (no in-kernel N^2 reduces),
    # passed as lane-wise (1, N) rows (both hop states are carried transposed).
    deg_s = jnp.sum(A_bar, axis=1)[None, :]                          # (1, N) out-degree
    deg_t = jnp.sum(A_bar, axis=0)[None, :]                          # (1, N) in-degree
    inv_deg_s = jnp.where(deg_s > 0.0, 1.0 / deg_s, 0.0)
    inv_deg_t = jnp.where(deg_t > 0.0, 1.0 / deg_t, 0.0)

    # the only N^2 operand travels as bf16; f32 accumulation happens in-kernel
    A_bar_bf16 = A_bar.astype(jnp.bfloat16)

    # fused MLP weights
    W0 = jnp.concatenate([params["w_s0"], params["w_t0"]], axis=1)   # (F, 2H)
    W1 = jnp.zeros((2 * H, 2 * H), jnp.float32)
    W1 = W1.at[:H, :H].set(params["w_s1"])
    W1 = W1.at[H:, H:].set(params["w_t1"])                           # blockdiag(w_s1, w_t1)

    # lane-padded cluster head: pad columns get -1e30 bias -> exp == 0 exactly
    Wp = jnp.zeros((2 * H, CP), jnp.float32).at[:, :C].set(params["W_prob"])
    bias_pad = jnp.full((1, CP), -1e30, jnp.float32).at[0, :C].set(params["bias"])

    vmem = pl.BlockSpec(memory_space=pltpu.MemorySpace.VMEM)
    smem = pl.BlockSpec(memory_space=pltpu.MemorySpace.SMEM)
    anyspace = pl.BlockSpec(memory_space=pl.ANY)

    out_shapes = (
        jax.ShapeDtypeStruct((N, ZP), jnp.float32),      # normalized z (lane-padded)
        jax.ShapeDtypeStruct((N, CP), jnp.float32),      # log_softmax (lane-padded)
    )

    flops = (2 * N * F_ * (2 * H)              # fused layer-1
             + 2 * N * (2 * H) * (2 * H)       # block-diag layer-2
             + hop * 2 * (2 * N * N * H)       # DIMPA propagation (s + t)
             + 2 * N * (2 * H) * CP)           # cluster head
    bytes_accessed = (2 * N * N                                           # bf16 A_bar
                      + 4 * (N * F_ + 2 * N + F_ * 2 * H + 4 * H * H
                             + 2 * H * CP + CP + N * ZP + N * CP)
                      + 8 * (hop + 1))
    cost = pl.CostEstimate(flops=int(flops), transcendentals=int(N * CP + 2 * N),
                           bytes_accessed=int(bytes_accessed))

    vmem_need = (2 * N * N                         # bf16 A_bar scratch
                 + 4 * (N * F_ + 2 * N)            # features + degree rows
                 + 4 * (F_ * 2 * H + 4 * H * H + 2 * H * CP + CP)
                 + 4 * (N * ZP + N * CP)           # outputs
                 + 4 * (12 * N * H))               # hop / feat temporaries
    try:
        vmem_cap = int(pltpu.get_tpu_info().vmem_capacity_bytes)
    except Exception:
        vmem_cap = 64 * 2 ** 20                    # conservative (v7x per-TC VMEM)
    vmem_budget = (vmem_cap * 3) // 4              # headroom for compiler scratch
    vmem_limit = int(min(max(2 * vmem_need, 32 * 2 ** 20), vmem_budget))
    cparams = pltpu.CompilerParams(vmem_limit_bytes=vmem_limit)

    z_pad, logp_pad = pl.pallas_call(
        make_digrac_kernel(hop, H, ZP),
        out_shape=out_shapes,
        in_specs=[vmem, anyspace, vmem, vmem, vmem, vmem, vmem, vmem, smem, smem],
        out_specs=(vmem, vmem),
        scratch_shapes=[pltpu.VMEM((N, N), jnp.bfloat16),
                        pltpu.SemaphoreType.DMA(())],
        compiler_params=cparams,
        cost_estimate=cost,
    )(features, A_bar_bf16, inv_deg_s, inv_deg_t, W0, W1, Wp, bias_pad,
      params["hop_w_s"], params["hop_w_t"])

    # cheap wrapper-side epilogue (keeps kernel stores lane-dense)
    z_norm = z_pad[:, :2 * H]
    logp = logp_pad[:, :C]
    prob = jnp.exp(logp)
    pred = jnp.argmax(logp, axis=1).astype(jnp.int32)   # int32, not int64
    return z_norm, logp, pred, prob


def init_params(key, num_features, hidden, nclass, hop):
    gain = 1.414

    def xavier(k, shape):
        fan_in, fan_out = shape
        bound = gain * math.sqrt(6.0 / (fan_in + fan_out))
        return jax.random.uniform(k, shape, jnp.float32, -bound, bound)

    ks = jax.random.split(key, 5)
    return {
        "w_s0": xavier(ks[0], (num_features, hidden)),
        "w_s1": xavier(ks[1], (hidden, hidden)),
        "w_t0": xavier(ks[2], (num_features, hidden)),
        "w_t1": xavier(ks[3], (hidden, hidden)),
        "W_prob": xavier(ks[4], (2 * hidden, nclass)),
        "bias": jnp.zeros((nclass,), jnp.float32),
        "hop_w_s": jnp.ones((hop + 1,), jnp.float32),   # DIMPA hop weights (init 1.0)
        "hop_w_t": jnp.ones((hop + 1,), jnp.float32),
    }


def reference_forward(edge_index, edge_weight, features, params, hop, fill_value):
    """Pure-JAX reference (same dense-adjacency formulation, HIGHEST precision)."""
    hp = jax.lax.Precision.HIGHEST
    N = features.shape[0]
    src, dst = edge_index[0], edge_index[1]
    A = jnp.zeros((N, N), jnp.float32).at[src, dst].add(edge_weight)
    diag = jnp.diagonal(A)
    A_bar = A + jnp.diag(jnp.where(diag == 0.0, fill_value, 0.0))
    deg_s = jnp.sum(A_bar, axis=1, keepdims=True)
    deg_t = jnp.sum(A_bar.T, axis=1, keepdims=True)
    a_s = A_bar * jnp.where(deg_s > 0, 1.0 / deg_s, 0.0)
    a_t = A_bar.T * jnp.where(deg_t > 0, 1.0 / deg_t, 0.0)

    x_s = jnp.maximum(jnp.dot(features, params["w_s0"], precision=hp), 0.0)
    x_s = jnp.dot(x_s, params["w_s1"], precision=hp)
    x_t = jnp.maximum(jnp.dot(features, params["w_t0"], precision=hp), 0.0)
    x_t = jnp.dot(x_t, params["w_t1"], precision=hp)

    feat_s = params["hop_w_s"][0] * x_s
    feat_t = params["hop_w_t"][0] * x_t
    curr_s, curr_t = x_s, x_t
    for h in range(1, hop + 1):
        curr_s = jnp.dot(a_s, curr_s, precision=hp)
        curr_t = jnp.dot(a_t, curr_t, precision=hp)
        feat_s = feat_s + params["hop_w_s"][h] * curr_s
        feat_t = feat_t + params["hop_w_t"][h] * curr_t
    z = jnp.concatenate([feat_s, feat_t], axis=1)

    logits = jnp.dot(z, params["W_prob"], precision=hp) + params["bias"][None, :]
    prob = jax.nn.softmax(logits, axis=1)
    logp = jax.nn.log_softmax(logits, axis=1)
    pred = jnp.argmax(logits, axis=1).astype(jnp.int32)
    z_norm = z / jnp.maximum(jnp.linalg.norm(z, axis=1, keepdims=True), 1e-12)
    return z_norm, logp, pred, prob


if __name__ == "__main__":
    # Small deterministic problem: N nodes, directed weighted graph.
    N, F, HIDDEN, NCLASS, HOP = 128, 16, 32, 5, 2
    FILL_VALUE, E = 0.5, 512

    key = jax.random.PRNGKey(0)
    k_src, k_dst, k_w, k_feat, k_par = jax.random.split(key, 5)
    src = jax.random.randint(k_src, (E,), 0, N, dtype=jnp.int32)
    dst = jax.random.randint(k_dst, (E,), 0, N, dtype=jnp.int32)
    edge_index = jnp.stack([src, dst], axis=0)                       # (2, E)
    edge_weight = jax.random.uniform(k_w, (E,), jnp.float32, 0.5, 1.5)
    features = jax.random.normal(k_feat, (N, F), jnp.float32)

    params = init_params(k_par, F, HIDDEN, NCLASS, HOP)

    z_norm, logp, pred, prob = digrac_forward(
        edge_index, edge_weight, features, params, HOP, FILL_VALUE)
    jax.block_until_ready((z_norm, logp, pred, prob))

    # Correctness check against pure-JAX reference (bf16 A_bar / hop states in
    # the kernel vs HIGHEST-precision f32 reference -> modest tolerances).
    z_ref, logp_ref, pred_ref, prob_ref = reference_forward(
        edge_index, edge_weight, features, params, HOP, FILL_VALUE)
    assert z_norm.shape == (N, 2 * HIDDEN) and logp.shape == (N, NCLASS)
    assert pred.shape == (N,) and prob.shape == (N, NCLASS)
    assert jnp.allclose(z_norm, z_ref, atol=5e-2, rtol=5e-2)
    assert jnp.allclose(prob, prob_ref, atol=5e-2, rtol=5e-2)
    assert jnp.allclose(logp, logp_ref, atol=1e-1, rtol=5e-2)
    # argmax self-consistency with the returned probabilities
    assert jnp.all(pred == jnp.argmax(prob, axis=1).astype(jnp.int32))

    print("KERNEL_OK")
</pallas_src>

<mosaic_0001>
module attributes {stable_mosaic.version = 11 : i64} {
  func.func @kernel(%arg0: memref<128x16xf32, #tpu.memory_space<vmem>>, %arg1: memref<128x128xbf16, #tpu.memory_space<any>>, %arg2: memref<1x128xf32, #tpu.memory_space<vmem>>, %arg3: memref<1x128xf32, #tpu.memory_space<vmem>>, %arg4: memref<16x64xf32, #tpu.memory_space<vmem>>, %arg5: memref<64x64xf32, #tpu.memory_space<vmem>>, %arg6: memref<64x128xf32, #tpu.memory_space<vmem>>, %arg7: memref<1x128xf32, #tpu.memory_space<vmem>>, %arg8: memref<3xf32, #tpu.memory_space<smem>>, %arg9: memref<3xf32, #tpu.memory_space<smem>>, %arg10: memref<128x128xf32, #tpu.memory_space<vmem>>, %arg11: memref<128x128xf32, #tpu.memory_space<vmem>>, %arg12: memref<128x128xbf16, #tpu.memory_space<vmem>>, %arg13: memref<!tpu.dma_semaphore, #tpu.memory_space<semaphore_mem>>) attributes {dimension_semantics = [], scalar_prefetch = 0 : i64, scratch_operands = 2 : i64, tpu.core_type = #tpu.core_type<tc>} {
    tpu.enqueue_dma source(%arg1 : memref<128x128xbf16, #tpu.memory_space<any>>) target(%arg12 : memref<128x128xbf16, #tpu.memory_space<vmem>>) target_semaphore(%arg13 : memref<!tpu.dma_semaphore, #tpu.memory_space<semaphore_mem>>)
    %c0 = arith.constant 0 : index
    %c0_0 = arith.constant 0 : index
    %0 = vector.load %arg0[%c0, %c0_0] : memref<128x16xf32, #tpu.memory_space<vmem>>, vector<128x16xf32>
    %c0_1 = arith.constant 0 : index
    %c0_2 = arith.constant 0 : index
    %1 = vector.load %arg2[%c0_1, %c0_2] : memref<1x128xf32, #tpu.memory_space<vmem>>, vector<1x128xf32>
    %c0_3 = arith.constant 0 : index
    %c0_4 = arith.constant 0 : index
    %2 = vector.load %arg3[%c0_3, %c0_4] : memref<1x128xf32, #tpu.memory_space<vmem>>, vector<1x128xf32>
    %c0_5 = arith.constant 0 : index
    %c0_6 = arith.constant 0 : index
    %3 = vector.load %arg4[%c0_5, %c0_6] : memref<16x64xf32, #tpu.memory_space<vmem>>, vector<16x64xf32>
    %cst = arith.constant dense<0.000000e+00> : vector<128x64xf32>
    %4 = tpu.matmul %0, %3, %cst {dimension_numbers = #tpu.dot_dimension_numbers<[1], [0], [0], [1], [0, 0, 1, 1], [], []>} : vector<128x16xf32>, vector<16x64xf32>, vector<128x64xf32> -> vector<128x64xf32>
    %cst_7 = arith.constant 0.000000e+00 : f32
    %5 = vector.broadcast %cst_7 : f32 to vector<128x64xf32>
    %6 = arith.maximumf %4, %5 : vector<128x64xf32>
    %c0_8 = arith.constant 0 : index
    %c0_9 = arith.constant 0 : index
    %7 = vector.load %arg5[%c0_8, %c0_9] : memref<64x64xf32, #tpu.memory_space<vmem>>, vector<64x64xf32>
    %cst_10 = arith.constant dense<0.000000e+00> : vector<128x64xf32>
    %8 = tpu.matmul %6, %7, %cst_10 {dimension_numbers = #tpu.dot_dimension_numbers<[1], [0], [0], [1], [0, 0, 1, 1], [], []>} : vector<128x64xf32>, vector<64x64xf32>, vector<128x64xf32> -> vector<128x64xf32>
    %9 = tpu.transpose %8, [1, 0] : vector<128x64xf32> -> vector<64x128xf32>
    %10 = vector.extract_strided_slice %9 {offsets = [0, 0], sizes = [32, 128], strides = [1, 1]} : vector<64x128xf32> to vector<32x128xf32>
    %11 = vector.extract_strided_slice %9 {offsets = [32, 0], sizes = [32, 128], strides = [1, 1]} : vector<64x128xf32> to vector<32x128xf32>
    %c0_11 = arith.constant 0 : index
    %12 = memref.load %arg8[%c0_11] : memref<3xf32, #tpu.memory_space<smem>>
    %13 = vector.broadcast %12 : f32 to vector<32x128xf32>
    %14 = arith.mulf %13, %10 : vector<32x128xf32>
    %c0_12 = arith.constant 0 : index
    %15 = memref.load %arg9[%c0_12] : memref<3xf32, #tpu.memory_space<smem>>
    %16 = vector.broadcast %15 : f32 to vector<32x128xf32>
    %17 = arith.mulf %16, %11 : vector<32x128xf32>
    tpu.wait_dma2 semaphore(%arg13 : memref<!tpu.dma_semaphore, #tpu.memory_space<semaphore_mem>>) src(%arg1 : memref<128x128xbf16, #tpu.memory_space<any>>) dst(%arg12 : memref<128x128xbf16, #tpu.memory_space<vmem>>)
    %c0_13 = arith.constant 0 : index
    %c0_14 = arith.constant 0 : index
    %18 = vector.load %arg12[%c0_13, %c0_14] : memref<128x128xbf16, #tpu.memory_space<vmem>>, vector<128x128xbf16>
    %19 = arith.truncf %10 : vector<32x128xf32> to vector<32x128xbf16>
    %cst_15 = arith.constant dense<0.000000e+00> : vector<32x128xf32>
    %20 = tpu.matmul %19, %18, %cst_15 {dimension_numbers = #tpu.dot_dimension_numbers<[1], [1], [0], [0], [0, 0, 1, 0], [], []>} : vector<32x128xbf16>, vector<128x128xbf16>, vector<32x128xf32> -> vector<32x128xf32>
    %21 = vector.broadcast %1 : vector<1x128xf32> to vector<32x128xf32>
    %22 = arith.mulf %20, %21 : vector<32x128xf32>
    %23 = arith.truncf %11 : vector<32x128xf32> to vector<32x128xbf16>
    %cst_16 = arith.constant dense<0.000000e+00> : vector<32x128xf32>
    %24 = tpu.matmul %23, %18, %cst_16 {dimension_numbers = #tpu.dot_dimension_numbers<[1], [0], [0], [1], [0, 0, 1, 1], [], []>} : vector<32x128xbf16>, vector<128x128xbf16>, vector<32x128xf32> -> vector<32x128xf32>
    %25 = vector.broadcast %2 : vector<1x128xf32> to vector<32x128xf32>
    %26 = arith.mulf %24, %25 : vector<32x128xf32>
    %c1 = arith.constant 1 : index
    %27 = memref.load %arg8[%c1] : memref<3xf32, #tpu.memory_space<smem>>
    %28 = vector.broadcast %27 : f32 to vector<32x128xf32>
    %29 = arith.mulf %28, %22 : vector<32x128xf32>
    %30 = arith.addf %14, %29 : vector<32x128xf32>
    %c1_17 = arith.constant 1 : index
    %31 = memref.load %arg9[%c1_17] : memref<3xf32, #tpu.memory_space<smem>>
    %32 = vector.broadcast %31 : f32 to vector<32x128xf32>
    %33 = arith.mulf %32, %26 : vector<32x128xf32>
    %34 = arith.addf %17, %33 : vector<32x128xf32>
    %35 = arith.truncf %22 : vector<32x128xf32> to vector<32x128xbf16>
    %cst_18 = arith.constant dense<0.000000e+00> : vector<32x128xf32>
    %36 = tpu.matmul %35, %18, %cst_18 {dimension_numbers = #tpu.dot_dimension_numbers<[1], [1], [0], [0], [0, 0, 1, 0], [], []>} : vector<32x128xbf16>, vector<128x128xbf16>, vector<32x128xf32> -> vector<32x128xf32>
    %37 = vector.broadcast %1 : vector<1x128xf32> to vector<32x128xf32>
    %38 = arith.mulf %36, %37 : vector<32x128xf32>
    %39 = arith.truncf %26 : vector<32x128xf32> to vector<32x128xbf16>
    %cst_19 = arith.constant dense<0.000000e+00> : vector<32x128xf32>
    %40 = tpu.matmul %39, %18, %cst_19 {dimension_numbers = #tpu.dot_dimension_numbers<[1], [0], [0], [1], [0, 0, 1, 1], [], []>} : vector<32x128xbf16>, vector<128x128xbf16>, vector<32x128xf32> -> vector<32x128xf32>
    %41 = vector.broadcast %2 : vector<1x128xf32> to vector<32x128xf32>
    %42 = arith.mulf %40, %41 : vector<32x128xf32>
    %c2 = arith.constant 2 : index
    %43 = memref.load %arg8[%c2] : memref<3xf32, #tpu.memory_space<smem>>
    %44 = vector.broadcast %43 : f32 to vector<32x128xf32>
    %45 = arith.mulf %44, %38 : vector<32x128xf32>
    %46 = arith.addf %30, %45 : vector<32x128xf32>
    %c2_20 = arith.constant 2 : index
    %47 = memref.load %arg9[%c2_20] : memref<3xf32, #tpu.memory_space<smem>>
    %48 = vector.broadcast %47 : f32 to vector<32x128xf32>
    %49 = arith.mulf %48, %42 : vector<32x128xf32>
    %50 = arith.addf %34, %49 : vector<32x128xf32>
    %51 = tpu.concatenate %46, %50 in 0 : vector<32x128xf32>, vector<32x128xf32> -> vector<64x128xf32>
    %52 = tpu.transpose %51, [1, 0] : vector<64x128xf32> -> vector<128x64xf32>
    %c0_21 = arith.constant 0 : index
    %c0_22 = arith.constant 0 : index
    %53 = vector.load %arg6[%c0_21, %c0_22] : memref<64x128xf32, #tpu.memory_space<vmem>>, vector<64x128xf32>
    %cst_23 = arith.constant dense<0.000000e+00> : vector<128x128xf32>
    %54 = tpu.matmul %52, %53, %cst_23 {dimension_numbers = #tpu.dot_dimension_numbers<[1], [0], [0], [1], [0, 0, 1, 1], [], []>} : vector<128x64xf32>, vector<64x128xf32>, vector<128x128xf32> -> vector<128x128xf32>
    %c0_24 = arith.constant 0 : index
    %c0_25 = arith.constant 0 : index
    %55 = vector.load %arg7[%c0_24, %c0_25] : memref<1x128xf32, #tpu.memory_space<vmem>>, vector<1x128xf32>
    %56 = vector.broadcast %55 : vector<1x128xf32> to vector<128x128xf32>
    %57 = arith.addf %54, %56 : vector<128x128xf32>
    %cst_26 = arith.constant dense<0xFF800000> : vector<128xf32>
    %58 = vector.multi_reduction <maximumf>, %57, %cst_26 [1] : vector<128x128xf32> to vector<128xf32>
    %59 = vector.shape_cast %58 : vector<128xf32> to vector<128x1xf32>
    %60 = vector.broadcast %59 : vector<128x1xf32> to vector<128x128xf32>
    %61 = arith.subf %57, %60 : vector<128x128xf32>
    %62 = math.exp %61 : vector<128x128xf32>
    %cst_27 = arith.constant dense<0.000000e+00> : vector<128xf32>
    %63 = vector.multi_reduction <add>, %62, %cst_27 [1] : vector<128x128xf32> to vector<128xf32>
    %64 = vector.shape_cast %63 : vector<128xf32> to vector<128x1xf32>
    %65 = math.log %64 : vector<128x1xf32>
    %66 = vector.broadcast %65 : vector<128x1xf32> to vector<128x128xf32>
    %67 = arith.subf %61, %66 : vector<128x128xf32>
    %c0_28 = arith.constant 0 : index
    %c0_29 = arith.constant 0 : index
    %68 = vector.load %arg11[%c0_28, %c0_29] : memref<128x128xf32, #tpu.memory_space<vmem>>, vector<128x128xf32>
    tpu.vector_store %arg11[%c0_28, %c0_29], %67 {strides = array<i32>} : memref<128x128xf32, #tpu.memory_space<vmem>>, vector<128x128xf32>,
    %69 = arith.mulf %52, %52 : vector<128x64xf32>
    %cst_30 = arith.constant dense<0.000000e+00> : vector<128xf32>
    %70 = vector.multi_reduction <add>, %69, %cst_30 [1] : vector<128x64xf32> to vector<128xf32>
    %71 = vector.shape_cast %70 : vector<128xf32> to vector<128x1xf32>
    %cst_31 = arith.constant 1.000000e-24 : f32
    %72 = vector.broadcast %cst_31 : f32 to vector<128x1xf32>
    %73 = arith.maximumf %71, %72 : vector<128x1xf32>
    %74 = math.rsqrt %73 : vector<128x1xf32>
    %75 = vector.broadcast %74 : vector<128x1xf32> to vector<128x64xf32>
    %76 = arith.mulf %52, %75 : vector<128x64xf32>
    %cst_32 = arith.constant 0.000000e+00 : f32
    %77 = vector.broadcast %cst_32 : f32 to vector<128x64xf32>
    %78 = tpu.concatenate %76, %77 in 1 : vector<128x64xf32>, vector<128x64xf32> -> vector<128x128xf32>
    %c0_33 = arith.constant 0 : index
    %c0_34 = arith.constant 0 : index
    %79 = vector.load %arg10[%c0_33, %c0_34] : memref<128x128xf32, #tpu.memory_space<vmem>>, vector<128x128xf32>
    tpu.vector_store %arg10[%c0_33, %c0_34], %78 {strides = array<i32>} : memref<128x128xf32, #tpu.memory_space<vmem>>, vector<128x128xf32>,
    return
  }
}

</mosaic_0001>

<llo_original>
// kernel: tpu_custom_call.1
$region0: #{tpu_custom_call.1}
  #allocation0 [shape = 'u32[]', space=smem, size = 0x4, offset = 0x4, fixed_abs, tag = 'smem constant byte address 0x4 - core index']
  #allocation1 [shape = 'u32[144,128]{1,0:T(1,128)}', space=vmem, size = 0x12000, scoped, tag = 'internal scratch']
  #allocation2 [shape = 'bf16[128,128]{1,0:T(16,128)(2,1)}', space=vmem, size = 0x8000, scoped, tag = 'scratch operand']
  #allocation3 [shape = 's32[1]{0}', space=sflag, size = 0x4, scoped, tag = 'scratch operand']
  #allocation14 [shape = 's32[]', space=sflag, size = 0x4, offset = 0, fixed_abs, tag = 'sflag constant byte address 0x0 - dummy sync flag']
  %s0 = inlined_call_operand.vmem [shape: f32[128,16], index: 0, kind: input, shape index: {}]
  %s1 = inlined_call_operand.vmem [shape: bf16[128,128], index: 1, kind: input, shape index: {}]
  %s2 = inlined_call_operand.vmem [shape: f32[1,128], index: 2, kind: input, shape index: {}]
  %s3 = inlined_call_operand.vmem [shape: f32[1,128], index: 3, kind: input, shape index: {}]
  %s4 = inlined_call_operand.vmem [shape: f32[16,64], index: 4, kind: input, shape index: {}]
  %s5 = inlined_call_operand.vmem [shape: f32[64,64], index: 5, kind: input, shape index: {}]
  %s6 = inlined_call_operand.hbm [shape: f32[64,128], index: 6, kind: input, shape index: {}]
  %s7 = inlined_call_operand.vmem [shape: f32[1,128], index: 7, kind: input, shape index: {}]
  %s8 = inlined_call_operand.vmem [shape: f32[3], index: 8, kind: input, shape index: {}]
  %s9 = inlined_call_operand.vmem [shape: f32[3], index: 9, kind: input, shape index: {}]
  %s10 = inlined_call_operand.hbm [shape: f32[128,128], index: 10, kind: output, shape index: {0}]
  %s11 = inlined_call_operand.hbm [shape: f32[128,128], index: 11, kind: output, shape index: {1}]
  %12 = xla_tuple %s10, %s11
  %s13 = sld [smem:[#allocation0]]
  $region100: #{tpu_custom_call.1} parent=0
    _
  %s15 = ssub.s32 1, %s13
  %s16 = scalar_select 0, %s15, %s13
  $region1: #{tpu_custom_call.1} parent=0
    #allocation4 [shape = 'u8[32768]{0}', space=vmem, size = 0x8000, scoped, tag = 'input window, operand 6, single buffered']
    #allocation5 [shape = 's32[1]{0}', space=sflag, size = 0x4, scoped, tag = 'scoped memory for tpu_custom_call.1']
    #allocation6 [shape = 's32[1]{0}', space=sflag, size = 0x4, scoped, tag = 'scoped memory for tpu_custom_call.1']
    #allocation7 [shape = 's32[1]{0}', space=sflag, size = 0x4, scoped, tag = 'scoped memory for tpu_custom_call.1']
    #allocation8 [shape = 'u8[512]{0}', space=smem, size = 0x200, scoped, tag = 'input window, operand 8, single buffered']
    #allocation9 [shape = 'u8[512]{0}', space=smem, size = 0x200, scoped, tag = 'input window, operand 9, single buffered']
    #allocation10 [shape = 's32[1]{0}', space=sflag, size = 0x4, scoped, tag = 'scoped memory for tpu_custom_call.1']
    #allocation11 [shape = 'u8[65536]{0}', space=vmem, size = 0x10000, scoped, tag = 'output window, operand 0, single buffered']
    #allocation12 [shape = 'u8[65536]{0}', space=vmem, size = 0x10000, scoped, tag = 'output window, operand 1, single buffered']
    #allocation13 [shape = 's32[1]{0}', space=sflag, size = 0x4, scoped, tag = 'scoped memory for tpu_custom_call.1']
    %17 = vsyncpa [#allocation5], 0
    %18 = vsyncpa [#allocation7], 0
    %19 = vsyncpa [#allocation10], 0
    %20 = vsyncpa [#allocation6], 0
    %21 = vsyncpa [#allocation13], 0
    // Predicated region
    $region2: #{tpu_custom_call.1} parent=1 // pred_check
      _
    $region3: #{tpu_custom_call.1} parent=1 // pred_check_branch
      %23 = sbr.rel (0) target = $region5
    $region4: #{tpu_custom_call.1} parent=1 // pred_region
      _
    $region5: #{tpu_custom_call.1} parent=1 // pred_fallthru
      _
    // Predicated region
    $region6: #{tpu_custom_call.1} parent=1 // pred_check
      _
    $region7: #{tpu_custom_call.1} parent=1 // pred_check_branch
      %25 = sbr.rel (0) target = $region9
    $region8: #{tpu_custom_call.1} parent=1 // pred_region
      _
    $region9: #{tpu_custom_call.1} parent=1 // pred_fallthru
      _
    // Predicated region
    $region10: #{tpu_custom_call.1} parent=1 // pred_check
      _
    $region11: #{tpu_custom_call.1} parent=1 // pred_check_branch
      %27 = sbr.rel (0) target = $region13
    $region12: #{tpu_custom_call.1} parent=1 // pred_region
      _
    $region13: #{tpu_custom_call.1} parent=1 // pred_fallthru
      _
    // Predicated region
    $region14: #{tpu_custom_call.1} parent=1 // pred_check
      _
    $region15: #{tpu_custom_call.1} parent=1 // pred_check_branch
      %29 = sbr.rel (0) target = $region17
    $region16: #{tpu_custom_call.1} parent=1 // pred_region
      _
    $region17: #{tpu_custom_call.1} parent=1 // pred_fallthru
      _
    // Predicated region
    $region18: #{tpu_custom_call.1} parent=1 // pred_check
      _
    $region19: #{tpu_custom_call.1} parent=1 // pred_check_branch
      %31 = sbr.rel (0) target = $region21
    $region20: #{tpu_custom_call.1} parent=1 // pred_region
      _
    $region21: #{tpu_custom_call.1} parent=1 // pred_fallthru
      _
    // Predicated region
    $region22: #{tpu_custom_call.1} parent=1 // pred_check
      _
    $region23: #{tpu_custom_call.1} parent=1 // pred_check_branch
      %33 = sbr.rel (0) target = $region25
    $region24: #{tpu_custom_call.1} parent=1 // pred_region
      %s35 = ssub.s32 1024, 1024
      %36 = vsyncadd [#allocation5], %s35
      %s37 = sshll.u32 [#allocation4], 4
      %s38 = int_to_ptr.vmem [resolvable:$true] %s37
      %43 = dma.hbm_to_vmem [thread:$0]  %s6, 1024, %s38, [#allocation5], 128, 128, 8
    $region25: #{tpu_custom_call.1} parent=1 // pred_fallthru
      _
    // Predicated region
    $region26: #{tpu_custom_call.1} parent=1 // pred_check
      _
    $region27: #{tpu_custom_call.1} parent=1 // pred_check_branch
      %45 = sbr.rel (0) target = $region29
    $region28: #{tpu_custom_call.1} parent=1 // pred_region
      _
    $region29: #{tpu_custom_call.1} parent=1 // pred_fallthru
      _
    // Predicated region
    $region30: #{tpu_custom_call.1} parent=1 // pred_check
      _
    $region31: #{tpu_custom_call.1} parent=1 // pred_check_branch
      %47 = sbr.rel (0) target = $region33
    $region32: #{tpu_custom_call.1} parent=1 // pred_region
      %s49 = ssub.s32 16, 16
      %50 = vsyncadd [#allocation7], %s49
      %s52 = sshll.u32 %s8, 4
      %s53 = int_to_ptr.vmem [resolvable:$true] %s52
      %55 = dma.vmem_to_smem %s53, 16, [#allocation8], [#allocation7]
    $region33: #{tpu_custom_call.1} parent=1 // pred_fallthru
      _
    // Predicated region
    $region34: #{tpu_custom_call.1} parent=1 // pred_check
      _
    $region35: #{tpu_custom_call.1} parent=1 // pred_check_branch
      %57 = sbr.rel (0) target = $region37
    $region36: #{tpu_custom_call.1} parent=1 // pred_region
      %s59 = ssub.s32 16, 16
      %60 = vsyncadd [#allocation10], %s59
      %s62 = sshll.u32 %s9, 4
      %s63 = int_to_ptr.vmem [resolvable:$true] %s62
      %65 = dma.vmem_to_smem %s63, 16, [#allocation9], [#allocation10]
    $region37: #{tpu_custom_call.1} parent=1 // pred_fallthru
      _
    // Predicated region
    $region38: #{tpu_custom_call.1} parent=1 // pred_check
      _
    $region39: #{tpu_custom_call.1} parent=1 // pred_check_branch
      %67 = sbr.rel (0) target = $region41
    $region40: #{tpu_custom_call.1} parent=1 // pred_region
      %68 = dma.done [#allocation5], 1024
    $region41: #{tpu_custom_call.1} parent=1 // pred_fallthru
      _
    // Predicated region
    $region42: #{tpu_custom_call.1} parent=1 // pred_check
      _
    $region43: #{tpu_custom_call.1} parent=1 // pred_check_branch
      %70 = sbr.rel (0) target = $region45
    $region44: #{tpu_custom_call.1} parent=1 // pred_region
      %71 = dma.done [#allocation7], 16
    $region45: #{tpu_custom_call.1} parent=1 // pred_fallthru
      _
    // Predicated region
    $region46: #{tpu_custom_call.1} parent=1 // pred_check
      _
    $region47: #{tpu_custom_call.1} parent=1 // pred_check_branch
      %73 = sbr.rel (0) target = $region49
    $region48: #{tpu_custom_call.1} parent=1 // pred_region
      %74 = dma.done [#allocation10], 16
    $region49: #{tpu_custom_call.1} parent=1 // pred_fallthru
      _
    %75 = sfence
    %p78 = scmp.lt.u32.totalorder 64, 8
    %p79 = pneg %p78
    // Predicated region
    $region50: #{tpu_custom_call.1} parent=1 // pred_check
      _
    $region51: #{tpu_custom_call.1} parent=1 // pred_check_branch
      %81 = sbr.rel (%p78) target = $region53
    $region52: #{tpu_custom_call.1} parent=1 // pred_region
      %s96 = sand.u32 64, 7
      %p97 = scmp.eq.s32.totalorder %s96, 0
      // Predicated region
      $region65: #{tpu_custom_call.1} parent=52 // pred_check
        %p98 = pneg %p97
      $region66: #{tpu_custom_call.1} parent=52 // pred_check_branch
        %100 = sbr.rel (%p98) target = $region68
      $region67: #{tpu_custom_call.1} parent=52 // pred_region
        loop: start=0, step=1, limit=1
        $region69: #{tpu_custom_call.1} parent=67 // loop_pre_header
          _
        $region70: #{tpu_custom_call.1} parent=67 // loop_header
          %s102 = sphi 0, %s106
          %p103 = scmp.ge.s32.totalorder %s102, 1
          %s107 = sphi %s1, %s1
          %s108 = sphi [#allocation2], [#allocation2]
        $region71: #{tpu_custom_call.1} parent=67 // loop_header_branch
          %105 = sbr.rel (%p103) target = $region75
        $region72: #{tpu_custom_call.1} parent=67 // loop_body
          %v109 = vld [vmem:[%s107] sm:$0xff]
          %110 = vst [vmem:[%s108] sm:$0xff] %v109
          %v111 = vld [vmem:[%s107 + $0x8] sm:$0xff]
          %112 = vst [vmem:[%s108 + $0x8] sm:$0xff] %v111
          %v113 = vld [vmem:[%s107 + $0x10] sm:$0xff]
          %114 = vst [vmem:[%s108 + $0x10] sm:$0xff] %v113
          %v115 = vld [vmem:[%s107 + $0x18] sm:$0xff]
          %116 = vst [vmem:[%s108 + $0x18] sm:$0xff] %v115
          %v117 = vld [vmem:[%s107 + $0x20] sm:$0xff]
          %118 = vst [vmem:[%s108 + $0x20] sm:$0xff] %v117
          %v119 = vld [vmem:[%s107 + $0x28] sm:$0xff]
          %120 = vst [vmem:[%s108 + $0x28] sm:$0xff] %v119
          %v121 = vld [vmem:[%s107 + $0x30] sm:$0xff]
          %122 = vst [vmem:[%s108 + $0x30] sm:$0xff] %v121
          %v123 = vld [vmem:[%s107 + $0x38] sm:$0xff]
          %124 = vst [vmem:[%s108 + $0x38] sm:$0xff] %v123
        $region73: #{tpu_custom_call.1} parent=67 // loop_footer
          %s106 = sadd.s32 1, %s102
        $region74: #{tpu_custom_call.1} parent=67 // loop_footer_branch
          %101 = sbr.rel target = $region70
        $region75: #{tpu_custom_call.1} parent=67 // loop_exit
          _
      $region68: #{tpu_custom_call.1} parent=52 // pred_fallthru
        _
      %p125 = pneg %p97
      // Predicated region
      $region76: #{tpu_custom_call.1} parent=52 // pred_check
        _
      $region77: #{tpu_custom_call.1} parent=52 // pred_check_branch
        %127 = sbr.rel (%p97) target = $region79
      $region78: #{tpu_custom_call.1} parent=52 // pred_region
        %s128 = sand.u32 64, 7
      $region79: #{tpu_custom_call.1} parent=52 // pred_fallthru
        _
    $region53: #{tpu_custom_call.1} parent=1 // pred_fallthru
      _
    // Predicated region
    $region54: #{tpu_custom_call.1} parent=1 // pred_check
      %p82 = pneg %p78
    $region55: #{tpu_custom_call.1} parent=1 // pred_check_branch
      %84 = sbr.rel (%p82) target = $region57
    $region56: #{tpu_custom_call.1} parent=1 // pred_region
      %s85 = sshllo.u32 0, 64
      loop: start=0, step=1, limit=1
      $region58: #{tpu_custom_call.1} parent=56 // loop_pre_header
        _
      $region59: #{tpu_custom_call.1} parent=56 // loop_header
        %s87 = sphi 0, %s91
        %p88 = scmp.ge.s32.totalorder %s87, 1
        %s92 = sphi %s1, %s1
        %s93 = sphi [#allocation2], [#allocation2]
      $region60: #{tpu_custom_call.1} parent=56 // loop_header_branch
        %90 = sbr.rel (%p88) target = $region64
      $region61: #{tpu_custom_call.1} parent=56 // loop_body
        %v94 = vld [vmem:[%s92] sm:%s85]
        %95 = vst [vmem:[%s93] sm:%s85] %v94
      $region62: #{tpu_custom_call.1} parent=56 // loop_footer
        %s91 = sadd.s32 1, %s87
      $region63: #{tpu_custom_call.1} parent=56 // loop_footer_branch
        %86 = sbr.rel target = $region59
      $region64: #{tpu_custom_call.1} parent=56 // loop_exit
        _
    $region57: #{tpu_custom_call.1} parent=1 // pred_fallthru
      _
    // Predicated region
    $region80: #{tpu_custom_call.1} parent=1 // pred_check
      _
    $region81: #{tpu_custom_call.1} parent=1 // pred_check_branch
      %131 = sbr.rel (0) target = $region83
    $region82: #{tpu_custom_call.1} parent=1 // pred_region
      %132 = vsyncadd [#allocation3], 1024
    $region83: #{tpu_custom_call.1} parent=1 // pred_fallthru
      _
    %v133 = vld [vmem:[%s0] sm:$0xff]
    %v134 = vld [vmem:[%s0 + $0x8] sm:$0xff]
    %v135 = vld [vmem:[%s0 + $0x10] sm:$0xff]
    %v136 = vld [vmem:[%s0 + $0x18] sm:$0xff]
    %v137 = vld [vmem:[%s0 + $0x20] sm:$0xff]
    %v138 = vld [vmem:[%s0 + $0x28] sm:$0xff]
    %v139 = vld [vmem:[%s0 + $0x30] sm:$0xff]
    %v140 = vld [vmem:[%s0 + $0x38] sm:$0xff]
    %v141 = vld [vmem:[%s0 + $0x40] sm:$0xff]
    %v142 = vld [vmem:[%s0 + $0x48] sm:$0xff]
    %v143 = vld [vmem:[%s0 + $0x50] sm:$0xff]
    %v144 = vld [vmem:[%s0 + $0x58] sm:$0xff]
    %v145 = vld [vmem:[%s0 + $0x60] sm:$0xff]
    %v146 = vld [vmem:[%s0 + $0x68] sm:$0xff]
    %v147 = vld [vmem:[%s0 + $0x70] sm:$0xff]
    %v148 = vld [vmem:[%s0 + $0x78] sm:$0xff]
    %v149 = vld [vmem:[%s2] sm:$0x1]
    %v150 = vld [vmem:[%s3] sm:$0x1]
    %v151 = vld [vmem:[%s4] sm:$0xff]
    %v152 = vld [vmem:[%s4 + $0x8] sm:$0xff]
    %vm153 = vcmask 130048
    %v155 = vsel %vm153, %v133, 0
    %v158 = vsel %vm153, %v134, 0
    %v161 = vsel %vm153, %v135, 0
    %v164 = vsel %vm153, %v136, 0
    %v167 = vsel %vm153, %v137, 0
    %v170 = vsel %vm153, %v138, 0
    %v173 = vsel %vm153, %v139, 0
    %v176 = vsel %vm153, %v140, 0
    %v179 = vsel %vm153, %v141, 0
    %v182 = vsel %vm153, %v142, 0
    %v185 = vsel %vm153, %v143, 0
    %v188 = vsel %vm153, %v144, 0
    %v191 = vsel %vm153, %v145, 0
    %v194 = vsel %vm153, %v146, 0
    %v197 = vsel %vm153, %v147, 0
    %v200 = vsel %vm153, %v148, 0
    %202 = vmatprep.subr.mxu0 0.0
    %203 = vmatpush1.msra.mxu0 %v151
    %204 = vmatprep.subr.mxu0 0.0
    %205 = vmatpush1.msra.mxu0 %v152
    %206 = vmatprep.subr.mxu0 0.0
    %207 = vmatpush1.msra.mxu0 0.0
    %208 = vmatprep.subr.mxu0 0.0
    %209 = vmatpush1.msra.mxu0 0.0
    %210 = vmatprep.subr.mxu0 0.0
    %211 = vmatpush1.msra.mxu0 0.0
    %212 = vmatprep.subr.mxu0 0.0
    %213 = vmatpush1.msra.mxu0 0.0
    %214 = vmatprep.subr.mxu0 0.0
    %215 = vmatpush1.msra.mxu0 0.0
    %216 = vmatprep.subr.mxu0 0.0
    %217 = vmatpush1.msra.mxu0 0.0
    %218 = vmatprep.subr.mxu0 0.0
    %219 = vmatpush1.msra.mxu0 0.0
    %220 = vmatprep.subr.mxu0 0.0
    %221 = vmatpush1.msra.mxu0 0.0
    %222 = vmatprep.subr.mxu0 0.0
    %223 = vmatpush1.msra.mxu0 0.0
    %224 = vmatprep.subr.mxu0 0.0
    %225 = vmatpush1.msra.mxu0 0.0
    %226 = vmatprep.subr.mxu0 0.0
    %227 = vmatpush1.msra.mxu0 0.0
    %228 = vmatprep.subr.mxu0 0.0
    %229 = vmatpush1.msra.mxu0 0.0
    %230 = vmatprep.subr.mxu0 0.0
    %231 = vmatpush1.msra.mxu0 0.0
    %232 = vmatprep.subr.mxu0 0.0
    %233 = vmatpush1.msra.mxu0 0.0
    %234 = vmatprep.subr.mxu0 0.0
    %235 = vmatpush1.msra.mxu0 0.0
    %236 = vmatprep.subr.mxu0 0.0
    %237 = vmatpush1.msra.mxu0 0.0
    %238 = vmatprep.subr.mxu0 0.0
    %239 = vmatpush1.msra.mxu0 0.0
    %240 = vmatprep.subr.mxu0 0.0
    %241 = vmatpush1.msra.mxu0 0.0
    %242 = vmatprep.subr.mxu0 0.0
    %243 = vmatpush1.msra.mxu0 0.0
    %244 = vmatprep.subr.mxu0 0.0
    %245 = vmatpush1.msra.mxu0 0.0
    %246 = vmatprep.subr.mxu0 0.0
    %247 = vmatpush1.msra.mxu0 0.0
    %248 = vmatprep.subr.mxu0 0.0
    %249 = vmatpush1.msra.mxu0 0.0
    %250 = vmatprep.subr.mxu0 0.0
    %251 = vmatpush1.msra.mxu0 0.0
    %252 = vmatprep.subr.mxu0 0.0
    %253 = vmatpush1.msra.mxu0 0.0
    %254 = vmatprep.subr.mxu0 0.0
    %255 = vmatpush1.msra.mxu0 0.0
    %256 = vmatprep.subr.mxu0 0.0
    %257 = vmatpush1.msra.mxu0 0.0
    %258 = vmatprep.subr.mxu0 0.0
    %259 = vmatpush1.msra.mxu0 0.0
    %260 = vmatprep.subr.mxu0 0.0
    %261 = vmatpush1.msra.mxu0 0.0
    %262 = vmatprep.subr.mxu0 0.0
    %263 = vmatpush1.msra.mxu0 0.0
    %264 = vmatprep.subr.mxu0 0.0
    %265 = vmatpush1.msra.mxu0 0.0
    %266 = vmatprep.mubr.f32.mxu0 0.0
    %267 = vmatmul.mubr.f32.gmra.mrb[0].mxu0 %v155
    %v268 = vpop.f32.mrb[0].mxu0
    %v269 = vadd.f32 0.0, %v268
    %v270 = vpop.f32.mrb[0].mxu0
    %271 = vmatprep.mubr.f32.mxu0 0.0
    %272 = vmatmul.mubr.f32.gmra.mrb[0].mxu0 %v158
    %v273 = vpop.f32.mrb[0].mxu0
    %v274 = vadd.f32 0.0, %v273
    %v275 = vpop.f32.mrb[0].mxu0
    %276 = vmatprep.mubr.f32.mxu0 0.0
    %277 = vmatmul.mubr.f32.gmra.mrb[0].mxu0 %v161
    %v278 = vpop.f32.mrb[0].mxu0
    %v279 = vadd.f32 0.0, %v278
    %v280 = vpop.f32.mrb[0].mxu0
    %281 = vmatprep.mubr.f32.mxu0 0.0
    %282 = vmatmul.mubr.f32.gmra.mrb[0].mxu0 %v164
    %v283 = vpop.f32.mrb[0].mxu0
    %v284 = vadd.f32 0.0, %v283
    %v285 = vpop.f32.mrb[0].mxu0
    %286 = vmatprep.mubr.f32.mxu0 0.0
    %287 = vmatmul.mubr.f32.gmra.mrb[0].mxu0 %v167
    %v288 = vpop.f32.mrb[0].mxu0
    %v289 = vadd.f32 0.0, %v288
    %v290 = vpop.f32.mrb[0].mxu0
    %291 = vmatprep.mubr.f32.mxu0 0.0
    %292 = vmatmul.mubr.f32.gmra.mrb[0].mxu0 %v170
    %v293 = vpop.f32.mrb[0].mxu0
    %v294 = vadd.f32 0.0, %v293
    %v295 = vpop.f32.mrb[0].mxu0
    %296 = vmatprep.mubr.f32.mxu0 0.0
    %297 = vmatmul.mubr.f32.gmra.mrb[0].mxu0 %v173
    %v298 = vpop.f32.mrb[0].mxu0
    %v299 = vadd.f32 0.0, %v298
    %v300 = vpop.f32.mrb[0].mxu0
    %301 = vmatprep.mubr.f32.mxu0 0.0
    %302 = vmatmul.mubr.f32.gmra.mrb[0].mxu0 %v176
    %v303 = vpop.f32.mrb[0].mxu0
    %v304 = vadd.f32 0.0, %v303
    %v305 = vpop.f32.mrb[0].mxu0
    %306 = vmatprep.mubr.f32.mxu0 0.0
    %307 = vmatmul.mubr.f32.gmra.mrb[0].mxu0 %v179
    %v308 = vpop.f32.mrb[0].mxu0
    %v309 = vadd.f32 0.0, %v308
    %v310 = vpop.f32.mrb[0].mxu0
    %311 = vmatprep.mubr.f32.mxu0 0.0
    %312 = vmatmul.mubr.f32.gmra.mrb[0].mxu0 %v182
    %v313 = vpop.f32.mrb[0].mxu0
    %v314 = vadd.f32 0.0, %v313
    %v315 = vpop.f32.mrb[0].mxu0
    %316 = vmatprep.mubr.f32.mxu0 0.0
    %317 = vmatmul.mubr.f32.gmra.mrb[0].mxu0 %v185
    %v318 = vpop.f32.mrb[0].mxu0
    %v319 = vadd.f32 0.0, %v318
    %v320 = vpop.f32.mrb[0].mxu0
    %321 = vmatprep.mubr.f32.mxu0 0.0
    %322 = vmatmul.mubr.f32.gmra.mrb[0].mxu0 %v188
    %v323 = vpop.f32.mrb[0].mxu0
    %v324 = vadd.f32 0.0, %v323
    %v325 = vpop.f32.mrb[0].mxu0
    %326 = vmatprep.mubr.f32.mxu0 0.0
    %327 = vmatmul.mubr.f32.gmra.mrb[0].mxu0 %v191
    %v328 = vpop.f32.mrb[0].mxu0
    %v329 = vadd.f32 0.0, %v328
    %v330 = vpop.f32.mrb[0].mxu0
    %331 = vmatprep.mubr.f32.mxu0 0.0
    %332 = vmatmul.mubr.f32.gmra.mrb[0].mxu0 %v194
    %v333 = vpop.f32.mrb[0].mxu0
    %v334 = vadd.f32 0.0, %v333
    %v335 = vpop.f32.mrb[0].mxu0
    %336 = vmatprep.mubr.f32.mxu0 0.0
    %337 = vmatmul.mubr.f32.gmra.mrb[0].mxu0 %v197
    %v338 = vpop.f32.mrb[0].mxu0
    %v339 = vadd.f32 0.0, %v338
    %v340 = vpop.f32.mrb[0].mxu0
    %341 = vmatprep.mubr.f32.mxu0 0.0
    %342 = vmatmul.mubr.f32.gmra.mrb[0].mxu0 %v200
    %v343 = vpop.f32.mrb[0].mxu0
    %v344 = vadd.f32 0.0, %v343
    %v345 = vpop.f32.mrb[0].mxu0
    %346 = vdwg.mxu0
    %v347 = vmax.f32 %v269, 0.0
    %v348 = vmax.f32 %v274, 0.0
    %v349 = vmax.f32 %v279, 0.0
    %v350 = vmax.f32 %v284, 0.0
    %v351 = vmax.f32 %v289, 0.0
    %v352 = vmax.f32 %v294, 0.0
    %v353 = vmax.f32 %v299, 0.0
    %v354 = vmax.f32 %v304, 0.0
    %v355 = vmax.f32 %v309, 0.0
    %v356 = vmax.f32 %v314, 0.0
    %v357 = vmax.f32 %v319, 0.0
    %v358 = vmax.f32 %v324, 0.0
    %v359 = vmax.f32 %v329, 0.0
    %v360 = vmax.f32 %v334, 0.0
    %v361 = vmax.f32 %v339, 0.0
    %v362 = vmax.f32 %v344, 0.0
    %v363 = vld [vmem:[%s5] sm:$0xff]
    %v364 = vld [vmem:[%s5 + $0x8] sm:$0xff]
    %v365 = vld [vmem:[%s5 + $0x10] sm:$0xff]
    %v366 = vld [vmem:[%s5 + $0x18] sm:$0xff]
    %v367 = vld [vmem:[%s5 + $0x20] sm:$0xff]
    %v368 = vld [vmem:[%s5 + $0x28] sm:$0xff]
    %v369 = vld [vmem:[%s5 + $0x30] sm:$0xff]
    %v370 = vld [vmem:[%s5 + $0x38] sm:$0xff]
    %vm371 = vcmask 523264
    %v373 = vsel %vm371, %v347, 0
    %v376 = vsel %vm371, %v348, 0
    %v379 = vsel %vm371, %v349, 0
    %v382 = vsel %vm371, %v350, 0
    %v385 = vsel %vm371, %v351, 0
    %v388 = vsel %vm371, %v352, 0
    %v391 = vsel %vm371, %v353, 0
    %v394 = vsel %vm371, %v354, 0
    %v397 = vsel %vm371, %v355, 0
    %v400 = vsel %vm371, %v356, 0
    %v403 = vsel %vm371, %v357, 0
    %v406 = vsel %vm371, %v358, 0
    %v409 = vsel %vm371, %v359, 0
    %v412 = vsel %vm371, %v360, 0
    %v415 = vsel %vm371, %v361, 0
    %v418 = vsel %vm371, %v362, 0
    %420 = vmatprep.subr.mxu0 0.0
    %421 = vmatpush1.msra.mxu0 %v363
    %422 = vmatprep.subr.mxu0 0.0
    %423 = vmatpush1.msra.mxu0 %v364
    %424 = vmatprep.subr.mxu0 0.0
    %425 = vmatpush1.msra.mxu0 %v365
    %426 = vmatprep.subr.mxu0 0.0
    %427 = vmatpush1.msra.mxu0 %v366
    %428 = vmatprep.subr.mxu0 0.0
    %429 = vmatpush1.msra.mxu0 %v367
    %430 = vmatprep.subr.mxu0 0.0
    %431 = vmatpush1.msra.mxu0 %v368
    %432 = vmatprep.subr.mxu0 0.0
    %433 = vmatpush1.msra.mxu0 %v369
    %434 = vmatprep.subr.mxu0 0.0
    %435 = vmatpush1.msra.mxu0 %v370
    %436 = vmatprep.subr.mxu0 0.0
    %437 = vmatpush1.msra.mxu0 0.0
    %438 = vmatprep.subr.mxu0 0.0
    %439 = vmatpush1.msra.mxu0 0.0
    %440 = vmatprep.subr.mxu0 0.0
    %441 = vmatpush1.msra.mxu0 0.0
    %442 = vmatprep.subr.mxu0 0.0
    %443 = vmatpush1.msra.mxu0 0.0
    %444 = vmatprep.subr.mxu0 0.0
    %445 = vmatpush1.msra.mxu0 0.0
    %446 = vmatprep.subr.mxu0 0.0
    %447 = vmatpush1.msra.mxu0 0.0
    %448 = vmatprep.subr.mxu0 0.0
    %449 = vmatpush1.msra.mxu0 0.0
    %450 = vmatprep.subr.mxu0 0.0
    %451 = vmatpush1.msra.mxu0 0.0
    %452 = vmatprep.subr.mxu0 0.0
    %453 = vmatpush1.msra.mxu0 0.0
    %454 = vmatprep.subr.mxu0 0.0
    %455 = vmatpush1.msra.mxu0 0.0
    %456 = vmatprep.subr.mxu0 0.0
    %457 = vmatpush1.msra.mxu0 0.0
    %458 = vmatprep.subr.mxu0 0.0
    %459 = vmatpush1.msra.mxu0 0.0
    %460 = vmatprep.subr.mxu0 0.0
    %461 = vmatpush1.msra.mxu0 0.0
    %462 = vmatprep.subr.mxu0 0.0
    %463 = vmatpush1.msra.mxu0 0.0
    %464 = vmatprep.subr.mxu0 0.0
    %465 = vmatpush1.msra.mxu0 0.0
    %466 = vmatprep.subr.mxu0 0.0
    %467 = vmatpush1.msra.mxu0 0.0
    %468 = vmatprep.subr.mxu0 0.0
    %469 = vmatpush1.msra.mxu0 0.0
    %470 = vmatprep.subr.mxu0 0.0
    %471 = vmatpush1.msra.mxu0 0.0
    %472 = vmatprep.subr.mxu0 0.0
    %473 = vmatpush1.msra.mxu0 0.0
    %474 = vmatprep.subr.mxu0 0.0
    %475 = vmatpush1.msra.mxu0 0.0
    %476 = vmatprep.subr.mxu0 0.0
    %477 = vmatpush1.msra.mxu0 0.0
    %478 = vmatprep.subr.mxu0 0.0
    %479 = vmatpush1.msra.mxu0 0.0
    %480 = vmatprep.subr.mxu0 0.0
    %481 = vmatpush1.msra.mxu0 0.0
    %482 = vmatprep.subr.mxu0 0.0
    %483 = vmatpush1.msra.mxu0 0.0
    %484 = vmatprep.mubr.f32.mxu0 0.0
    %485 = vmatmul.mubr.f32.gmra.mrb[0].mxu0 %v373
    %v486 = vpop.f32.mrb[0].mxu0
    %v487 = vadd.f32 0.0, %v486
    %v488 = vpop.f32.mrb[0].mxu0
    %489 = vmatprep.mubr.f32.mxu0 0.0
    %490 = vmatmul.mubr.f32.gmra.mrb[0].mxu0 %v376
    %v491 = vpop.f32.mrb[0].mxu0
    %v492 = vadd.f32 0.0, %v491
    %v493 = vpop.f32.mrb[0].mxu0
    %494 = vmatprep.mubr.f32.mxu0 0.0
    %495 = vmatmul.mubr.f32.gmra.mrb[0].mxu0 %v379
    %v496 = vpop.f32.mrb[0].mxu0
    %v497 = vadd.f32 0.0, %v496
    %v498 = vpop.f32.mrb[0].mxu0
    %499 = vmatprep.mubr.f32.mxu0 0.0
    %500 = vmatmul.mubr.f32.gmra.mrb[0].mxu0 %v382
    %v501 = vpop.f32.mrb[0].mxu0
    %v502 = vadd.f32 0.0, %v501
    %v503 = vpop.f32.mrb[0].mxu0
    %504 = vmatprep.mubr.f32.mxu0 0.0
    %505 = vmatmul.mubr.f32.gmra.mrb[0].mxu0 %v385
    %v506 = vpop.f32.mrb[0].mxu0
    %v507 = vadd.f32 0.0, %v506
    %v508 = vpop.f32.mrb[0].mxu0
    %509 = vmatprep.mubr.f32.mxu0 0.0
    %510 = vmatmul.mubr.f32.gmra.mrb[0].mxu0 %v388
    %v511 = vpop.f32.mrb[0].mxu0
    %v512 = vadd.f32 0.0, %v511
    %v513 = vpop.f32.mrb[0].mxu0
    %514 = vmatprep.mubr.f32.mxu0 0.0
    %515 = vmatmul.mubr.f32.gmra.mrb[0].mxu0 %v391
    %v516 = vpop.f32.mrb[0].mxu0
    %v517 = vadd.f32 0.0, %v516
    %v518 = vpop.f32.mrb[0].mxu0
    %519 = vmatprep.mubr.f32.mxu0 0.0
    %520 = vmatmul.mubr.f32.gmra.mrb[0].mxu0 %v394
    %v521 = vpop.f32.mrb[0].mxu0
    %v522 = vadd.f32 0.0, %v521
    %v523 = vpop.f32.mrb[0].mxu0
    %524 = vmatprep.mubr.f32.mxu0 0.0
    %525 = vmatmul.mubr.f32.gmra.mrb[0].mxu0 %v397
    %v526 = vpop.f32.mrb[0].mxu0
    %v527 = vadd.f32 0.0, %v526
    %v528 = vpop.f32.mrb[0].mxu0
    %529 = vmatprep.mubr.f32.mxu0 0.0
    %530 = vmatmul.mubr.f32.gmra.mrb[0].mxu0 %v400
    %v531 = vpop.f32.mrb[0].mxu0
    %v532 = vadd.f32 0.0, %v531
    %v533 = vpop.f32.mrb[0].mxu0
    %534 = vmatprep.mubr.f32.mxu0 0.0
    %535 = vmatmul.mubr.f32.gmra.mrb[0].mxu0 %v403
    %v536 = vpop.f32.mrb[0].mxu0
    %v537 = vadd.f32 0.0, %v536
    %v538 = vpop.f32.mrb[0].mxu0
    %539 = vmatprep.mubr.f32.mxu0 0.0
    %540 = vmatmul.mubr.f32.gmra.mrb[0].mxu0 %v406
    %v541 = vpop.f32.mrb[0].mxu0
    %v542 = vadd.f32 0.0, %v541
    %v543 = vpop.f32.mrb[0].mxu0
    %544 = vmatprep.mubr.f32.mxu0 0.0
    %545 = vmatmul.mubr.f32.gmra.mrb[0].mxu0 %v409
    %v546 = vpop.f32.mrb[0].mxu0
    %v547 = vadd.f32 0.0, %v546
    %v548 = vpop.f32.mrb[0].mxu0
    %549 = vmatprep.mubr.f32.mxu0 0.0
    %550 = vmatmul.mubr.f32.gmra.mrb[0].mxu0 %v412
    %v551 = vpop.f32.mrb[0].mxu0
    %v552 = vadd.f32 0.0, %v551
    %v553 = vpop.f32.mrb[0].mxu0
    %554 = vmatprep.mubr.f32.mxu0 0.0
    %555 = vmatmul.mubr.f32.gmra.mrb[0].mxu0 %v415
    %v556 = vpop.f32.mrb[0].mxu0
    %v557 = vadd.f32 0.0, %v556
    %v558 = vpop.f32.mrb[0].mxu0
    %559 = vmatprep.mubr.f32.mxu0 0.0
    %560 = vmatmul.mubr.f32.gmra.mrb[0].mxu0 %v418
    %v561 = vpop.f32.mrb[0].mxu0
    %v562 = vadd.f32 0.0, %v561
    %v563 = vpop.f32.mrb[0].mxu0
    %564 = vdwg.mxu0
    %565 = vxpose.xlu0.b32.start [1/16] %v487, 128
    %566 = vxpose.xlu0.b32.cont [2/16] %v492, 128
    %567 = vxpose.xlu0.b32.cont [3/16] %v497, 128
    %568 = vxpose.xlu0.b32.cont [4/16] %v502, 128
    %569 = vxpose.xlu0.b32.cont [5/16] %v507, 128
    %570 = vxpose.xlu0.b32.cont [6/16] %v512, 128
    %571 = vxpose.xlu0.b32.cont [7/16] %v517, 128
    %572 = vxpose.xlu0.b32.cont [8/16] %v522, 128
    %573 = vxpose.xlu0.b32.cont [9/16] %v527, 128
    %574 = vxpose.xlu0.b32.cont [10/16] %v532, 128
    %575 = vxpose.xlu0.b32.cont [11/16] %v537, 128
    %576 = vxpose.xlu0.b32.cont [12/16] %v542, 128
    %577 = vxpose.xlu0.b32.cont [13/16] %v547, 128
    %578 = vxpose.xlu0.b32.cont [14/16] %v552, 128
    %579 = vxpose.xlu0.b32.cont [15/16] %v557, 128
    %580 = vxpose.xlu0.b32.end [16/16] %v562, 128
    %v581 = vpop.trf.xlu0
    %v582 = vpop.trf.xlu0
    %v583 = vpop.trf.xlu0
    %v584 = vpop.trf.xlu0
    %v585 = vpop.trf.xlu0
    %v586 = vpop.trf.xlu0
    %v587 = vpop.trf.xlu0
    %v588 = vpop.trf.xlu0
    %v589 = vpop.trf.xlu0
    %v590 = vpop.trf.xlu0
    %v591 = vpop.trf.xlu0
    %v592 = vpop.trf.xlu0
    %v593 = vpop.trf.xlu0
    %v594 = vpop.trf.xlu0
    %v595 = vpop.trf.xlu0
    %v596 = vpop.trf.xlu0
    %s597 = sld [smem:[#allocation8]]
    %v598 = vstv %s597
    %v599 = vmul.f32 %v598, %v581
    %v600 = vmul.f32 %v598, %v582
    %v601 = vmul.f32 %v598, %v583
    %v602 = vmul.f32 %v598, %v584
    %s603 = sld [smem:[#allocation9]]
    %v604 = vstv %s603
    %v605 = vmul.f32 %v604, %v585
    %v606 = vmul.f32 %v604, %v586
    %v607 = vmul.f32 %v604, %v587
    %v608 = vmul.f32 %v604, %v588
    %s609 = smul.u32 4, 16
    %s610 = smul.u32 %s609, 1
    %s611 = sshll.u32 %s610, 4
    %612 = dma.done [#allocation3], %s611
    %v613 = vld [vmem:[#allocation2] sm:$0xff]
    %v614 = vld [vmem:[#allocation2 + $0x8] sm:$0xff]
    %v615 = vld [vmem:[#allocation2 + $0x10] sm:$0xff]
    %v616 = vld [vmem:[#allocation2 + $0x18] sm:$0xff]
    %v617 = vld [vmem:[#allocation2 + $0x20] sm:$0xff]
    %v618 = vld [vmem:[#allocation2 + $0x28] sm:$0xff]
    %v619 = vld [vmem:[#allocation2 + $0x30] sm:$0xff]
    %v620 = vld [vmem:[#allocation2 + $0x38] sm:$0xff]
    %v621 = vpack.c.bf16 %v582, %v581
    %v622 = vpack.c.bf16 %v584, %v583
    %623 = vmatprep.subr.bf16.mxu0 0
    %624 = vmatpush1.bf16.xpose.msra.mxu0 %v613
    %625 = vmatprep.subr.bf16.mxu0 0
    %626 = vmatpush1.bf16.xpose.msra.mxu0 %v614
    %627 = vmatprep.subr.bf16.mxu0 0
    %628 = vmatpush1.bf16.xpose.msra.mxu0 %v615
    %629 = vmatprep.subr.bf16.mxu0 0
    %630 = vmatpush1.bf16.xpose.msra.mxu0 %v616
    %631 = vmatprep.subr.bf16.mxu0 0
    %632 = vmatpush1.bf16.xpose.msra.mxu0 %v617
    %633 = vmatprep.subr.bf16.mxu0 0
    %634 = vmatpush1.bf16.xpose.msra.mxu0 %v618
    %635 = vmatprep.subr.bf16.mxu0 0
    %636 = vmatpush1.bf16.xpose.msra.mxu0 %v619
    %637 = vmatprep.subr.bf16.mxu0 0
    %638 = vmatpush1.bf16.xpose.msra.mxu0 %v620
    %639 = vmatprep.subr.bf16.mxu0 0
    %640 = vmatpush1.bf16.xpose.msra.mxu0 0
    %641 = vmatprep.subr.bf16.mxu0 0
    %642 = vmatpush1.bf16.xpose.msra.mxu0 0
    %643 = vmatprep.subr.bf16.mxu0 0
    %644 = vmatpush1.bf16.xpose.msra.mxu0 0
    %645 = vmatprep.subr.bf16.mxu0 0
    %646 = vmatpush1.bf16.xpose.msra.mxu0 0
    %647 = vmatprep.subr.bf16.mxu0 0
    %648 = vmatpush1.bf16.xpose.msra.mxu0 0
    %649 = vmatprep.subr.bf16.mxu0 0
    %650 = vmatpush1.bf16.xpose.msra.mxu0 0
    %651 = vmatprep.subr.bf16.mxu0 0
    %652 = vmatpush1.bf16.xpose.msra.mxu0 0
    %653 = vmatprep.subr.bf16.mxu0 0
    %654 = vmatpush1.bf16.xpose.msra.mxu0 0
    %655 = vmatprep.mubr.bf16.mxu0 0
    %656 = vmatmul.mubr.bf16.gmra.mrb[0].mxu0 %v621
    %v657 = vpop.f32.mrb[0].mxu0
    %v658 = vadd.f32 0.0, %v657
    %v659 = vpop.f32.mrb[0].mxu0
    %v660 = vpop.f32.mrb[0].mxu0
    %v661 = vadd.f32 0.0, %v660
    %v662 = vpop.f32.mrb[0].mxu0
    %663 = vmatprep.mubr.bf16.mxu0 0
    %664 = vmatmul.mubr.bf16.gmra.mrb[0].mxu0 %v622
    %v665 = vpop.f32.mrb[0].mxu0
    %v666 = vadd.f32 0.0, %v665
    %v667 = vpop.f32.mrb[0].mxu0
    %v668 = vpop.f32.mrb[0].mxu0
    %v669 = vadd.f32 0.0, %v668
    %v670 = vpop.f32.mrb[0].mxu0
    %671 = vdwg.mxu0
    %v673 = vlaneseq
    %v674 = vshrl.u32 %v673, 7
    %v675 = vsub.s32 0, %v674
    %v676 = vrot.slane %v149, %v675
    %v678 = vmul.f32 %v658, %v676
    %v679 = vmul.f32 %v661, %v676
    %v680 = vmul.f32 %v666, %v676
    %v681 = vmul.f32 %v669, %v676
    %v682 = vpack.c.bf16 %v586, %v585
    %v683 = vpack.c.bf16 %v588, %v587
    %684 = vmatprep.subr.bf16.mxu0 0
    %685 = vmatpush1.bf16.msra.mxu0 %v613
    %686 = vmatprep.subr.bf16.mxu0 0
    %687 = vmatpush1.bf16.msra.mxu0 %v614
    %688 = vmatprep.subr.bf16.mxu0 0
    %689 = vmatpush1.bf16.msra.mxu0 %v615
    %690 = vmatprep.subr.bf16.mxu0 0
    %691 = vmatpush1.bf16.msra.mxu0 %v616
    %692 = vmatprep.subr.bf16.mxu0 0
    %693 = vmatpush1.bf16.msra.mxu0 %v617
    %694 = vmatprep.subr.bf16.mxu0 0
    %695 = vmatpush1.bf16.msra.mxu0 %v618
    %696 = vmatprep.subr.bf16.mxu0 0
    %697 = vmatpush1.bf16.msra.mxu0 %v619
    %698 = vmatprep.subr.bf16.mxu0 0
    %699 = vmatpush1.bf16.msra.mxu0 %v620
    %700 = vmatprep.subr.bf16.mxu0 0
    %701 = vmatpush1.bf16.msra.mxu0 0
    %702 = vmatprep.subr.bf16.mxu0 0
    %703 = vmatpush1.bf16.msra.mxu0 0
    %704 = vmatprep.subr.bf16.mxu0 0
    %705 = vmatpush1.bf16.msra.mxu0 0
    %706 = vmatprep.subr.bf16.mxu0 0
    %707 = vmatpush1.bf16.msra.mxu0 0
    %708 = vmatprep.subr.bf16.mxu0 0
    %709 = vmatpush1.bf16.msra.mxu0 0
    %710 = vmatprep.subr.bf16.mxu0 0
    %711 = vmatpush1.bf16.msra.mxu0 0
    %712 = vmatprep.subr.bf16.mxu0 0
    %713 = vmatpush1.bf16.msra.mxu0 0
    %714 = vmatprep.subr.bf16.mxu0 0
    %715 = vmatpush1.bf16.msra.mxu0 0
    %716 = vmatprep.mubr.bf16.mxu0 0
    %717 = vmatmul.mubr.bf16.gmra.mrb[0].mxu0 %v682
    %v718 = vpop.f32.mrb[0].mxu0
    %v719 = vadd.f32 0.0, %v718
    %v720 = vpop.f32.mrb[0].mxu0
    %v721 = vpop.f32.mrb[0].mxu0
    %v722 = vadd.f32 0.0, %v721
    %v723 = vpop.f32.mrb[0].mxu0
    %724 = vmatprep.mubr.bf16.mxu0 0
    %725 = vmatmul.mubr.bf16.gmra.mrb[0].mxu0 %v683
    %v726 = vpop.f32.mrb[0].mxu0
    %v727 = vadd.f32 0.0, %v726
    %v728 = vpop.f32.mrb[0].mxu0
    %v729 = vpop.f32.mrb[0].mxu0
    %v730 = vadd.f32 0.0, %v729
    %v731 = vpop.f32.mrb[0].mxu0
    %732 = vdwg.mxu0
    %v734 = vlaneseq
    %v735 = vshrl.u32 %v734, 7
    %v736 = vsub.s32 0, %v735
    %v737 = vrot.slane %v150, %v736
    %v739 = vmul.f32 %v719, %v737
    %v740 = vmul.f32 %v722, %v737
    %v741 = vmul.f32 %v727, %v737
    %v742 = vmul.f32 %v730, %v737
    %s743 = sld [smem:[#allocation8 + $0x1]]
    %v744 = vstv %s743
    %v745 = vmul.f32 %v744, %v678
    %v746 = vmul.f32 %v744, %v679
    %v747 = vmul.f32 %v744, %v680
    %v748 = vmul.f32 %v744, %v681
    %v749 = vadd.f32 %v599, %v745
    %v750 = vadd.f32 %v600, %v746
    %v751 = vadd.f32 %v601, %v747
    %v752 = vadd.f32 %v602, %v748
    %s753 = sld [smem:[#allocation9 + $0x1]]
    %v754 = vstv %s753
    %v755 = vmul.f32 %v754, %v739
    %v756 = vmul.f32 %v754, %v740
    %v757 = vmul.f32 %v754, %v741
    %v758 = vmul.f32 %v754, %v742
    %v759 = vadd.f32 %v605, %v755
    %v760 = vadd.f32 %v606, %v756
    %v761 = vadd.f32 %v607, %v757
    %v762 = vadd.f32 %v608, %v758
    %v763 = vpack.c.bf16 %v679, %v678
    %v764 = vpack.c.bf16 %v681, %v680
    %765 = vmatprep.subr.bf16.mxu0 0
    %766 = vmatpush1.bf16.xpose.msra.mxu0 %v613
    %767 = vmatprep.subr.bf16.mxu0 0
    %768 = vmatpush1.bf16.xpose.msra.mxu0 %v614
    %769 = vmatprep.subr.bf16.mxu0 0
    %770 = vmatpush1.bf16.xpose.msra.mxu0 %v615
    %771 = vmatprep.subr.bf16.mxu0 0
    %772 = vmatpush1.bf16.xpose.msra.mxu0 %v616
    %773 = vmatprep.subr.bf16.mxu0 0
    %774 = vmatpush1.bf16.xpose.msra.mxu0 %v617
    %775 = vmatprep.subr.bf16.mxu0 0
    %776 = vmatpush1.bf16.xpose.msra.mxu0 %v618
    %777 = vmatprep.subr.bf16.mxu0 0
    %778 = vmatpush1.bf16.xpose.msra.mxu0 %v619
    %779 = vmatprep.subr.bf16.mxu0 0
    %780 = vmatpush1.bf16.xpose.msra.mxu0 %v620
    %781 = vmatprep.subr.bf16.mxu0 0
    %782 = vmatpush1.bf16.xpose.msra.mxu0 0
    %783 = vmatprep.subr.bf16.mxu0 0
    %784 = vmatpush1.bf16.xpose.msra.mxu0 0
    %785 = vmatprep.subr.bf16.mxu0 0
    %786 = vmatpush1.bf16.xpose.msra.mxu0 0
    %787 = vmatprep.subr.bf16.mxu0 0
    %788 = vmatpush1.bf16.xpose.msra.mxu0 0
    %789 = vmatprep.subr.bf16.mxu0 0
    %790 = vmatpush1.bf16.xpose.msra.mxu0 0
    %791 = vmatprep.subr.bf16.mxu0 0
    %792 = vmatpush1.bf16.xpose.msra.mxu0 0
    %793 = vmatprep.subr.bf16.mxu0 0
    %794 = vmatpush1.bf16.xpose.msra.mxu0 0
    %795 = vmatprep.subr.bf16.mxu0 0
    %796 = vmatpush1.bf16.xpose.msra.mxu0 0
    %797 = vmatprep.mubr.bf16.mxu0 0
    %798 = vmatmul.mubr.bf16.gmra.mrb[0].mxu0 %v763
    %v799 = vpop.f32.mrb[0].mxu0
    %v800 = vadd.f32 0.0, %v799
    %v801 = vpop.f32.mrb[0].mxu0
    %v802 = vpop.f32.mrb[0].mxu0
    %v803 = vadd.f32 0.0, %v802
    %v804 = vpop.f32.mrb[0].mxu0
    %805 = vmatprep.mubr.bf16.mxu0 0
    %806 = vmatmul.mubr.bf16.gmra.mrb[0].mxu0 %v764
    %v807 = vpop.f32.mrb[0].mxu0
    %v808 = vadd.f32 0.0, %v807
    %v809 = vpop.f32.mrb[0].mxu0
    %v810 = vpop.f32.mrb[0].mxu0
    %v811 = vadd.f32 0.0, %v810
    %v812 = vpop.f32.mrb[0].mxu0
    %813 = vdwg.mxu0
    %v814 = vmul.f32 %v800, %v676
    %v815 = vmul.f32 %v803, %v676
    %v816 = vmul.f32 %v808, %v676
    %v817 = vmul.f32 %v811, %v676
    %v818 = vpack.c.bf16 %v740, %v739
    %v819 = vpack.c.bf16 %v742, %v741
    %820 = vmatprep.subr.bf16.mxu0 0
    %821 = vmatpush1.bf16.msra.mxu0 %v613
    %822 = vmatprep.subr.bf16.mxu0 0
    %823 = vmatpush1.bf16.msra.mxu0 %v614
    %824 = vmatprep.subr.bf16.mxu0 0
    %825 = vmatpush1.bf16.msra.mxu0 %v615
    %826 = vmatprep.subr.bf16.mxu0 0
    %827 = vmatpush1.bf16.msra.mxu0 %v616
    %828 = vmatprep.subr.bf16.mxu0 0
    %829 = vmatpush1.bf16.msra.mxu0 %v617
    %830 = vmatprep.subr.bf16.mxu0 0
    %831 = vmatpush1.bf16.msra.mxu0 %v618
    %832 = vmatprep.subr.bf16.mxu0 0
    %833 = vmatpush1.bf16.msra.mxu0 %v619
    %834 = vmatprep.subr.bf16.mxu0 0
    %835 = vmatpush1.bf16.msra.mxu0 %v620
    %836 = vmatprep.subr.bf16.mxu0 0
    %837 = vmatpush1.bf16.msra.mxu0 0
    %838 = vmatprep.subr.bf16.mxu0 0
    %839 = vmatpush1.bf16.msra.mxu0 0
    %840 = vmatprep.subr.bf16.mxu0 0
    %841 = vmatpush1.bf16.msra.mxu0 0
    %842 = vmatprep.subr.bf16.mxu0 0
    %843 = vmatpush1.bf16.msra.mxu0 0
    %844 = vmatprep.subr.bf16.mxu0 0
    %845 = vmatpush1.bf16.msra.mxu0 0
    %846 = vmatprep.subr.bf16.mxu0 0
    %847 = vmatpush1.bf16.msra.mxu0 0
    %848 = vmatprep.subr.bf16.mxu0 0
    %849 = vmatpush1.bf16.msra.mxu0 0
    %850 = vmatprep.subr.bf16.mxu0 0
    %851 = vmatpush1.bf16.msra.mxu0 0
    %852 = vmatprep.mubr.bf16.mxu0 0
    %853 = vmatmul.mubr.bf16.gmra.mrb[0].mxu0 %v818
    %v854 = vpop.f32.mrb[0].mxu0
    %v855 = vadd.f32 0.0, %v854
    %v856 = vpop.f32.mrb[0].mxu0
    %v857 = vpop.f32.mrb[0].mxu0
    %v858 = vadd.f32 0.0, %v857
    %v859 = vpop.f32.mrb[0].mxu0
    %860 = vmatprep.mubr.bf16.mxu0 0
    %861 = vmatmul.mubr.bf16.gmra.mrb[0].mxu0 %v819
    %v862 = vpop.f32.mrb[0].mxu0
    %v863 = vadd.f32 0.0, %v862
    %v864 = vpop.f32.mrb[0].mxu0
    %v865 = vpop.f32.mrb[0].mxu0
    %v866 = vadd.f32 0.0, %v865
    %v867 = vpop.f32.mrb[0].mxu0
    %868 = vdwg.mxu0
    %v869 = vmul.f32 %v855, %v737
    %v870 = vmul.f32 %v858, %v737
    %v871 = vmul.f32 %v863, %v737
    %v872 = vmul.f32 %v866, %v737
    %s873 = sld [smem:[#allocation8 + $0x2]]
    %v874 = vstv %s873
    %v875 = vmul.f32 %v874, %v814
    %v876 = vmul.f32 %v874, %v815
    %v877 = vmul.f32 %v874, %v816
    %v878 = vmul.f32 %v874, %v817
    %v879 = vadd.f32 %v749, %v875
    %v880 = vadd.f32 %v750, %v876
    %v881 = vadd.f32 %v751, %v877
    %v882 = vadd.f32 %v752, %v878
    %s883 = sld [smem:[#allocation9 + $0x2]]
    %v884 = vstv %s883
    %v885 = vmul.f32 %v884, %v869
    %v886 = vmul.f32 %v884, %v870
    %v887 = vmul.f32 %v884, %v871
    %v888 = vmul.f32 %v884, %v872
    %v889 = vadd.f32 %v759, %v885
    %v890 = vadd.f32 %v760, %v886
    %v891 = vadd.f32 %v761, %v887
    %v892 = vadd.f32 %v762, %v888
    %893 = vxpose.xlu0.b32.start [1/16] %v879, 128
    %894 = vxpose.xlu0.b32.cont [2/16] %v880, 128
    %895 = vxpose.xlu0.b32.cont [3/16] %v881, 128
    %896 = vxpose.xlu0.b32.cont [4/16] %v882, 128
    %897 = vxpose.xlu0.b32.cont [5/16] %v889, 128
    %898 = vxpose.xlu0.b32.cont [6/16] %v890, 128
    %899 = vxpose.xlu0.b32.cont [7/16] %v891, 128
    %900 = vxpose.xlu0.b32.cont [8/16] %v892, 128
    %901 = vxpose.xlu0.b32.cont [9/16] 0.0, 128
    %902 = vxpose.xlu0.b32.cont [10/16] 0.0, 128
    %903 = vxpose.xlu0.b32.cont [11/16] 0.0, 128
    %904 = vxpose.xlu0.b32.cont [12/16] 0.0, 128
    %905 = vxpose.xlu0.b32.cont [13/16] 0.0, 128
    %906 = vxpose.xlu0.b32.cont [14/16] 0.0, 128
    %907 = vxpose.xlu0.b32.cont [15/16] 0.0, 128
    %908 = vxpose.xlu0.b32.end [16/16] 0.0, 128
    %v909 = vpop.trf.xlu0
    %v910 = vpop.trf.xlu0
    %v911 = vpop.trf.xlu0
    %v912 = vpop.trf.xlu0
    %v913 = vpop.trf.xlu0
    %v914 = vpop.trf.xlu0
    %v915 = vpop.trf.xlu0
    %v916 = vpop.trf.xlu0
    %v917 = vpop.trf.xlu0
    %v918 = vpop.trf.xlu0
    %v919 = vpop.trf.xlu0
    %v920 = vpop.trf.xlu0
    %v921 = vpop.trf.xlu0
    %v922 = vpop.trf.xlu0
    %v923 = vpop.trf.xlu0
    %v924 = vpop.trf.xlu0
    %v925 = vld [vmem:[#allocation4] sm:$0xff]
    %v926 = vld [vmem:[#allocation4 + $0x8] sm:$0xff]
    %v927 = vld [vmem:[#allocation4 + $0x10] sm:$0xff]
    %v928 = vld [vmem:[#allocation4 + $0x18] sm:$0xff]
    %v929 = vld [vmem:[#allocation4 + $0x20] sm:$0xff]
    %v930 = vld [vmem:[#allocation4 + $0x28] sm:$0xff]
    %v931 = vld [vmem:[#allocation4 + $0x30] sm:$0xff]
    %v932 = vld [vmem:[#allocation4 + $0x38] sm:$0xff]
    %v933 = vld [vmem:[%s7] sm:$0x1]
    %v935 = vlaneseq
    %v936 = vshrl.u32 %v935, 7
    %v937 = vsub.s32 0, %v936
    %v938 = vrot.slane %v933, %v937
    %v941 = vsel %vm371, %v909, 0
    %v944 = vsel %vm371, %v910, 0
    %v947 = vsel %vm371, %v911, 0
    %v950 = vsel %vm371, %v912, 0
    %v953 = vsel %vm371, %v913, 0
    %v956 = vsel %vm371, %v914, 0
    %v959 = vsel %vm371, %v915, 0
    %v962 = vsel %vm371, %v916, 0
    %v965 = vsel %vm371, %v917, 0
    %v968 = vsel %vm371, %v918, 0
    %v971 = vsel %vm371, %v919, 0
    %v974 = vsel %vm371, %v920, 0
    %v977 = vsel %vm371, %v921, 0
    %v980 = vsel %vm371, %v922, 0
    %v983 = vsel %vm371, %v923, 0
    %v986 = vsel %vm371, %v924, 0
    %988 = vmatprep.subr.mxu0 0.0
    %989 = vmatpush1.msra.mxu0 %v925
    %990 = vmatprep.subr.mxu0 0.0
    %991 = vmatpush1.msra.mxu0 %v926
    %992 = vmatprep.subr.mxu0 0.0
    %993 = vmatpush1.msra.mxu0 %v927
    %994 = vmatprep.subr.mxu0 0.0
    %995 = vmatpush1.msra.mxu0 %v928
    %996 = vmatprep.subr.mxu0 0.0
    %997 = vmatpush1.msra.mxu0 %v929
    %998 = vmatprep.subr.mxu0 0.0
    %999 = vmatpush1.msra.mxu0 %v930
    %1000 = vmatprep.subr.mxu0 0.0
    %1001 = vmatpush1.msra.mxu0 %v931
    %1002 = vmatprep.subr.mxu0 0.0
    %1003 = vmatpush1.msra.mxu0 %v932
    %1004 = vmatprep.subr.mxu0 0.0
    %1005 = vmatpush1.msra.mxu0 0.0
    %1006 = vmatprep.subr.mxu0 0.0
    %1007 = vmatpush1.msra.mxu0 0.0
    %1008 = vmatprep.subr.mxu0 0.0
    %1009 = vmatpush1.msra.mxu0 0.0
    %1010 = vmatprep.subr.mxu0 0.0
    %1011 = vmatpush1.msra.mxu0 0.0
    %1012 = vmatprep.subr.mxu0 0.0
    %1013 = vmatpush1.msra.mxu0 0.0
    %1014 = vmatprep.subr.mxu0 0.0
    %1015 = vmatpush1.msra.mxu0 0.0
    %1016 = vmatprep.subr.mxu0 0.0
    %1017 = vmatpush1.msra.mxu0 0.0
    %1018 = vmatprep.subr.mxu0 0.0
    %1019 = vmatpush1.msra.mxu0 0.0
    %1020 = vmatprep.subr.mxu0 0.0
    %1021 = vmatpush1.msra.mxu0 0.0
    %1022 = vmatprep.subr.mxu0 0.0
    %1023 = vmatpush1.msra.mxu0 0.0
    %1024 = vmatprep.subr.mxu0 0.0
    %1025 = vmatpush1.msra.mxu0 0.0
    %1026 = vmatprep.subr.mxu0 0.0
    %1027 = vmatpush1.msra.mxu0 0.0
    %1028 = vmatprep.subr.mxu0 0.0
    %1029 = vmatpush1.msra.mxu0 0.0
    %1030 = vmatprep.subr.mxu0 0.0
    %1031 = vmatpush1.msra.mxu0 0.0
    %1032 = vmatprep.subr.mxu0 0.0
    %1033 = vmatpush1.msra.mxu0 0.0
    %1034 = vmatprep.subr.mxu0 0.0
    %1035 = vmatpush1.msra.mxu0 0.0
    %1036 = vmatprep.subr.mxu0 0.0
    %1037 = vmatpush1.msra.mxu0 0.0
    %1038 = vmatprep.subr.mxu0 0.0
    %1039 = vmatpush1.msra.mxu0 0.0
    %1040 = vmatprep.subr.mxu0 0.0
    %1041 = vmatpush1.msra.mxu0 0.0
    %1042 = vmatprep.subr.mxu0 0.0
    %1043 = vmatpush1.msra.mxu0 0.0
    %1044 = vmatprep.subr.mxu0 0.0
    %1045 = vmatpush1.msra.mxu0 0.0
    %1046 = vmatprep.subr.mxu0 0.0
    %1047 = vmatpush1.msra.mxu0 0.0
    %1048 = vmatprep.subr.mxu0 0.0
    %1049 = vmatpush1.msra.mxu0 0.0
    %1050 = vmatprep.subr.mxu0 0.0
    %1051 = vmatpush1.msra.mxu0 0.0
    %1052 = vmatprep.mubr.f32.mxu0 0.0
    %1053 = vmatmul.mubr.f32.gmra.mrb[0].mxu0 %v941
    %v1054 = vpop.f32.mrb[0].mxu0
    %v1055 = vadd.f32 %v938, %v1054
    %v1056 = vpop.f32.mrb[0].mxu0
    %1057 = vmatprep.mubr.f32.mxu0 0.0
    %1058 = vmatmul.mubr.f32.gmra.mrb[0].mxu0 %v944
    %v1059 = vpop.f32.mrb[0].mxu0
    %v1060 = vadd.f32 %v938, %v1059
    %v1061 = vpop.f32.mrb[0].mxu0
    %1062 = vmatprep.mubr.f32.mxu0 0.0
    %1063 = vmatmul.mubr.f32.gmra.mrb[0].mxu0 %v947
    %v1064 = vpop.f32.mrb[0].mxu0
    %v1065 = vadd.f32 %v938, %v1064
    %v1066 = vpop.f32.mrb[0].mxu0
    %1067 = vmatprep.mubr.f32.mxu0 0.0
    %1068 = vmatmul.mubr.f32.gmra.mrb[0].mxu0 %v950
    %v1069 = vpop.f32.mrb[0].mxu0
    %v1070 = vadd.f32 %v938, %v1069
    %v1071 = vpop.f32.mrb[0].mxu0
    %1072 = vmatprep.mubr.f32.mxu0 0.0
    %1073 = vmatmul.mubr.f32.gmra.mrb[0].mxu0 %v953
    %v1074 = vpop.f32.mrb[0].mxu0
    %v1075 = vadd.f32 %v938, %v1074
    %v1076 = vpop.f32.mrb[0].mxu0
    %1077 = vmatprep.mubr.f32.mxu0 0.0
    %1078 = vmatmul.mubr.f32.gmra.mrb[0].mxu0 %v956
    %v1079 = vpop.f32.mrb[0].mxu0
    %v1080 = vadd.f32 %v938, %v1079
    %v1081 = vpop.f32.mrb[0].mxu0
    %1082 = vmatprep.mubr.f32.mxu0 0.0
    %1083 = vmatmul.mubr.f32.gmra.mrb[0].mxu0 %v959
    %v1084 = vpop.f32.mrb[0].mxu0
    %v1085 = vadd.f32 %v938, %v1084
    %v1086 = vpop.f32.mrb[0].mxu0
    %1087 = vmatprep.mubr.f32.mxu0 0.0
    %1088 = vmatmul.mubr.f32.gmra.mrb[0].mxu0 %v962
    %v1089 = vpop.f32.mrb[0].mxu0
    %v1090 = vadd.f32 %v938, %v1089
    %v1091 = vpop.f32.mrb[0].mxu0
    %1092 = vmatprep.mubr.f32.mxu0 0.0
    %1093 = vmatmul.mubr.f32.gmra.mrb[0].mxu0 %v965
    %v1094 = vpop.f32.mrb[0].mxu0
    %v1095 = vadd.f32 %v938, %v1094
    %v1096 = vpop.f32.mrb[0].mxu0
    %1097 = vmatprep.mubr.f32.mxu0 0.0
    %1098 = vmatmul.mubr.f32.gmra.mrb[0].mxu0 %v968
    %v1099 = vpop.f32.mrb[0].mxu0
    %v1100 = vadd.f32 %v938, %v1099
    %v1101 = vpop.f32.mrb[0].mxu0
    %1102 = vmatprep.mubr.f32.mxu0 0.0
    %1103 = vmatmul.mubr.f32.gmra.mrb[0].mxu0 %v971
    %v1104 = vpop.f32.mrb[0].mxu0
    %v1105 = vadd.f32 %v938, %v1104
    %v1106 = vpop.f32.mrb[0].mxu0
    %1107 = vmatprep.mubr.f32.mxu0 0.0
    %1108 = vmatmul.mubr.f32.gmra.mrb[0].mxu0 %v974
    %v1109 = vpop.f32.mrb[0].mxu0
    %v1110 = vadd.f32 %v938, %v1109
    %v1111 = vpop.f32.mrb[0].mxu0
    %1112 = vmatprep.mubr.f32.mxu0 0.0
    %1113 = vmatmul.mubr.f32.gmra.mrb[0].mxu0 %v977
    %v1114 = vpop.f32.mrb[0].mxu0
    %v1115 = vadd.f32 %v938, %v1114
    %v1116 = vpop.f32.mrb[0].mxu0
    %1117 = vmatprep.mubr.f32.mxu0 0.0
    %1118 = vmatmul.mubr.f32.gmra.mrb[0].mxu0 %v980
    %v1119 = vpop.f32.mrb[0].mxu0
    %v1120 = vadd.f32 %v938, %v1119
    %v1121 = vpop.f32.mrb[0].mxu0
    %1122 = vmatprep.mubr.f32.mxu0 0.0
    %1123 = vmatmul.mubr.f32.gmra.mrb[0].mxu0 %v983
    %v1124 = vpop.f32.mrb[0].mxu0
    %v1125 = vadd.f32 %v938, %v1124
    %v1126 = vpop.f32.mrb[0].mxu0
    %1127 = vmatprep.mubr.f32.mxu0 0.0
    %1128 = vmatmul.mubr.f32.gmra.mrb[0].mxu0 %v986
    %v1129 = vpop.f32.mrb[0].mxu0
    %v1130 = vadd.f32 %v938, %v1129
    %v1131 = vpop.f32.mrb[0].mxu0
    %1132 = vdwg.mxu0
    %1133 = vmax.xlane.f32.xlu0 %v1055
    %v1134 = vpop.xlane.xlu0 %1133
    %1135 = vmax.xlane.f32.xlu0 %v1060
    %v1136 = vpop.xlane.xlu0 %1135
    %1137 = vmax.xlane.f32.xlu0 %v1065
    %v1138 = vpop.xlane.xlu0 %1137
    %1139 = vmax.xlane.f32.xlu0 %v1070
    %v1140 = vpop.xlane.xlu0 %1139
    %1141 = vmax.xlane.f32.xlu0 %v1075
    %v1142 = vpop.xlane.xlu0 %1141
    %1143 = vmax.xlane.f32.xlu0 %v1080
    %v1144 = vpop.xlane.xlu0 %1143
    %1145 = vmax.xlane.f32.xlu0 %v1085
    %v1146 = vpop.xlane.xlu0 %1145
    %1147 = vmax.xlane.f32.xlu0 %v1090
    %v1148 = vpop.xlane.xlu0 %1147
    %1149 = vmax.xlane.f32.xlu0 %v1095
    %v1150 = vpop.xlane.xlu0 %1149
    %1151 = vmax.xlane.f32.xlu0 %v1100
    %v1152 = vpop.xlane.xlu0 %1151
    %1153 = vmax.xlane.f32.xlu0 %v1105
    %v1154 = vpop.xlane.xlu0 %1153
    %1155 = vmax.xlane.f32.xlu0 %v1110
    %v1156 = vpop.xlane.xlu0 %1155
    %1157 = vmax.xlane.f32.xlu0 %v1115
    %v1158 = vpop.xlane.xlu0 %1157
    %1159 = vmax.xlane.f32.xlu0 %v1120
    %v1160 = vpop.xlane.xlu0 %1159
    %1161 = vmax.xlane.f32.xlu0 %v1125
    %v1162 = vpop.xlane.xlu0 %1161
    %1163 = vmax.xlane.f32.xlu0 %v1130
    %v1164 = vpop.xlane.xlu0 %1163
    %v1165 = vsub.f32 %v1055, %v1134
    %v1166 = vsub.f32 %v1060, %v1136
    %v1167 = vsub.f32 %v1065, %v1138
    %v1168 = vsub.f32 %v1070, %v1140
    %v1169 = vsub.f32 %v1075, %v1142
    %v1170 = vsub.f32 %v1080, %v1144
    %v1171 = vsub.f32 %v1085, %v1146
    %v1172 = vsub.f32 %v1090, %v1148
    %v1173 = vsub.f32 %v1095, %v1150
    %v1174 = vsub.f32 %v1100, %v1152
    %v1175 = vsub.f32 %v1105, %v1154
    %v1176 = vsub.f32 %v1110, %v1156
    %v1177 = vsub.f32 %v1115, %v1158
    %v1178 = vsub.f32 %v1120, %v1160
    %v1179 = vsub.f32 %v1125, %v1162
    %v1180 = vsub.f32 %v1130, %v1164
    %v1181 = vmul.f32 %v1165, 1.442695
    %v1182 = vpow.pop %v1181
    %v1183 = vmul.f32 %v1166, 1.442695
    %v1184 = vpow.pop %v1183
    %v1185 = vmul.f32 %v1167, 1.442695
    %v1186 = vpow.pop %v1185
    %v1187 = vmul.f32 %v1168, 1.442695
    %v1188 = vpow.pop %v1187
    %v1189 = vmul.f32 %v1169, 1.442695
    %v1190 = vpow.pop %v1189
    %v1191 = vmul.f32 %v1170, 1.442695
    %v1192 = vpow.pop %v1191
    %v1193 = vmul.f32 %v1171, 1.442695
    %v1194 = vpow.pop %v1193
    %v1195 = vmul.f32 %v1172, 1.442695
    %v1196 = vpow.pop %v1195
    %v1197 = vmul.f32 %v1173, 1.442695
    %v1198 = vpow.pop %v1197
    %v1199 = vmul.f32 %v1174, 1.442695
    %v1200 = vpow.pop %v1199
    %v1201 = vmul.f32 %v1175, 1.442695
    %v1202 = vpow.pop %v1201
    %v1203 = vmul.f32 %v1176, 1.442695
    %v1204 = vpow.pop %v1203
    %v1205 = vmul.f32 %v1177, 1.442695
    %v1206 = vpow.pop %v1205
    %v1207 = vmul.f32 %v1178, 1.442695
    %v1208 = vpow.pop %v1207
    %v1209 = vmul.f32 %v1179, 1.442695
    %v1210 = vpow.pop %v1209
    %v1211 = vmul.f32 %v1180, 1.442695
    %v1212 = vpow.pop %v1211
    %1213 = vadd.xlane.f32.xlu0 %v1182
    %v1214 = vpop.xlane.xlu0 %1213
    %1215 = vadd.xlane.f32.xlu0 %v1184
    %v1216 = vpop.xlane.xlu0 %1215
    %1217 = vadd.xlane.f32.xlu0 %v1186
    %v1218 = vpop.xlane.xlu0 %1217
    %1219 = vadd.xlane.f32.xlu0 %v1188
    %v1220 = vpop.xlane.xlu0 %1219
    %1221 = vadd.xlane.f32.xlu0 %v1190
    %v1222 = vpop.xlane.xlu0 %1221
    %1223 = vadd.xlane.f32.xlu0 %v1192
    %v1224 = vpop.xlane.xlu0 %1223
    %1225 = vadd.xlane.f32.xlu0 %v1194
    %v1226 = vpop.xlane.xlu0 %1225
    %1227 = vadd.xlane.f32.xlu0 %v1196
    %v1228 = vpop.xlane.xlu0 %1227
    %1229 = vadd.xlane.f32.xlu0 %v1198
    %v1230 = vpop.xlane.xlu0 %1229
    %1231 = vadd.xlane.f32.xlu0 %v1200
    %v1232 = vpop.xlane.xlu0 %1231
    %1233 = vadd.xlane.f32.xlu0 %v1202
    %v1234 = vpop.xlane.xlu0 %1233
    %1235 = vadd.xlane.f32.xlu0 %v1204
    %v1236 = vpop.xlane.xlu0 %1235
    %1237 = vadd.xlane.f32.xlu0 %v1206
    %v1238 = vpop.xlane.xlu0 %1237
    %1239 = vadd.xlane.f32.xlu0 %v1208
    %v1240 = vpop.xlane.xlu0 %1239
    %1241 = vadd.xlane.f32.xlu0 %v1210
    %v1242 = vpop.xlane.xlu0 %1241
    %1243 = vadd.xlane.f32.xlu0 %v1212
    %v1244 = vpop.xlane.xlu0 %1243
    %v1245 = vlog2.pop %v1214
    %v1246 = vmul.f32 %v1245, 0.6931472
    %v1247 = vlog2.pop %v1216
    %v1248 = vmul.f32 %v1247, 0.6931472
    %v1249 = vlog2.pop %v1218
    %v1250 = vmul.f32 %v1249, 0.6931472
    %v1251 = vlog2.pop %v1220
    %v1252 = vmul.f32 %v1251, 0.6931472
    %v1253 = vlog2.pop %v1222
    %v1254 = vmul.f32 %v1253, 0.6931472
    %v1255 = vlog2.pop %v1224
    %v1256 = vmul.f32 %v1255, 0.6931472
    %v1257 = vlog2.pop %v1226
    %v1258 = vmul.f32 %v1257, 0.6931472
    %v1259 = vlog2.pop %v1228
    %v1260 = vmul.f32 %v1259, 0.6931472
    %v1261 = vlog2.pop %v1230
    %v1262 = vmul.f32 %v1261, 0.6931472
    %v1263 = vlog2.pop %v1232
    %v1264 = vmul.f32 %v1263, 0.6931472
    %v1265 = vlog2.pop %v1234
    %v1266 = vmul.f32 %v1265, 0.6931472
    %v1267 = vlog2.pop %v1236
    %v1268 = vmul.f32 %v1267, 0.6931472
    %v1269 = vlog2.pop %v1238
    %v1270 = vmul.f32 %v1269, 0.6931472
    %v1271 = vlog2.pop %v1240
    %v1272 = vmul.f32 %v1271, 0.6931472
    %v1273 = vlog2.pop %v1242
    %v1274 = vmul.f32 %v1273, 0.6931472
    %v1275 = vlog2.pop %v1244
    %v1276 = vmul.f32 %v1275, 0.6931472
    %v1277 = vsub.f32 %v1165, %v1246
    %v1278 = vsub.f32 %v1166, %v1248
    %v1279 = vsub.f32 %v1167, %v1250
    %v1280 = vsub.f32 %v1168, %v1252
    %v1281 = vsub.f32 %v1169, %v1254
    %v1282 = vsub.f32 %v1170, %v1256
    %v1283 = vsub.f32 %v1171, %v1258
    %v1284 = vsub.f32 %v1172, %v1260
    %v1285 = vsub.f32 %v1173, %v1262
    %v1286 = vsub.f32 %v1174, %v1264
    %v1287 = vsub.f32 %v1175, %v1266
    %v1288 = vsub.f32 %v1176, %v1268
    %v1289 = vsub.f32 %v1177, %v1270
    %v1290 = vsub.f32 %v1178, %v1272
    %v1291 = vsub.f32 %v1179, %v1274
    %v1292 = vsub.f32 %v1180, %v1276
    %1293 = vst [vmem:[#allocation12] sm:$0xff] %v1277
    %1294 = vst [vmem:[#allocation12 + $0x8] sm:$0xff] %v1278
    %1295 = vst [vmem:[#allocation12 + $0x10] sm:$0xff] %v1279
    %1296 = vst [vmem:[#allocation12 + $0x18] sm:$0xff] %v1280
    %1297 = vst [vmem:[#allocation12 + $0x20] sm:$0xff] %v1281
    %1298 = vst [vmem:[#allocation12 + $0x28] sm:$0xff] %v1282
    %1299 = vst [vmem:[#allocation12 + $0x30] sm:$0xff] %v1283
    %1300 = vst [vmem:[#allocation12 + $0x38] sm:$0xff] %v1284
    %1301 = vst [vmem:[#allocation12 + $0x40] sm:$0xff] %v1285
    %1302 = vst [vmem:[#allocation12 + $0x48] sm:$0xff] %v1286
    %1303 = vst [vmem:[#allocation12 + $0x50] sm:$0xff] %v1287
    %1304 = vst [vmem:[#allocation12 + $0x58] sm:$0xff] %v1288
    %1305 = vst [vmem:[#allocation12 + $0x60] sm:$0xff] %v1289
    %1306 = vst [vmem:[#allocation12 + $0x68] sm:$0xff] %v1290
    %1307 = vst [vmem:[#allocation12 + $0x70] sm:$0xff] %v1291
    %1308 = vst [vmem:[#allocation12 + $0x78] sm:$0xff] %v1292
    %v1309 = vmul.f32 %v909, %v909
    %v1310 = vmul.f32 %v910, %v910
    %v1311 = vmul.f32 %v911, %v911
    %v1312 = vmul.f32 %v912, %v912
    %v1313 = vmul.f32 %v913, %v913
    %v1314 = vmul.f32 %v914, %v914
    %v1315 = vmul.f32 %v915, %v915
    %v1316 = vmul.f32 %v916, %v916
    %v1317 = vmul.f32 %v917, %v917
    %v1318 = vmul.f32 %v918, %v918
    %v1319 = vmul.f32 %v919, %v919
    %v1320 = vmul.f32 %v920, %v920
    %v1321 = vmul.f32 %v921, %v921
    %v1322 = vmul.f32 %v922, %v922
    %v1323 = vmul.f32 %v923, %v923
    %v1324 = vmul.f32 %v924, %v924
    %v1325 = vsel %vm371, %v1309, 0.0
    %1326 = vadd.xlane.f32.xlu0 %v1325
    %v1327 = vpop.xlane.xlu0 %1326
    %v1328 = vsel %vm371, %v1310, 0.0
    %1329 = vadd.xlane.f32.xlu0 %v1328
    %v1330 = vpop.xlane.xlu0 %1329
    %v1331 = vsel %vm371, %v1311, 0.0
    %1332 = vadd.xlane.f32.xlu0 %v1331
    %v1333 = vpop.xlane.xlu0 %1332
    %v1334 = vsel %vm371, %v1312, 0.0
    %1335 = vadd.xlane.f32.xlu0 %v1334
    %v1336 = vpop.xlane.xlu0 %1335
    %v1337 = vsel %vm371, %v1313, 0.0
    %1338 = vadd.xlane.f32.xlu0 %v1337
    %v1339 = vpop.xlane.xlu0 %1338
    %v1340 = vsel %vm371, %v1314, 0.0
    %1341 = vadd.xlane.f32.xlu0 %v1340
    %v1342 = vpop.xlane.xlu0 %1341
    %v1343 = vsel %vm371, %v1315, 0.0
    %1344 = vadd.xlane.f32.xlu0 %v1343
    %v1345 = vpop.xlane.xlu0 %1344
    %v1346 = vsel %vm371, %v1316, 0.0
    %1347 = vadd.xlane.f32.xlu0 %v1346
    %v1348 = vpop.xlane.xlu0 %1347
    %v1349 = vsel %vm371, %v1317, 0.0
    %1350 = vadd.xlane.f32.xlu0 %v1349
    %v1351 = vpop.xlane.xlu0 %1350
    %v1352 = vsel %vm371, %v1318, 0.0
    %1353 = vadd.xlane.f32.xlu0 %v1352
    %v1354 = vpop.xlane.xlu0 %1353
    %v1355 = vsel %vm371, %v1319, 0.0
    %1356 = vadd.xlane.f32.xlu0 %v1355
    %v1357 = vpop.xlane.xlu0 %1356
    %v1358 = vsel %vm371, %v1320, 0.0
    %1359 = vadd.xlane.f32.xlu0 %v1358
    %v1360 = vpop.xlane.xlu0 %1359
    %v1361 = vsel %vm371, %v1321, 0.0
    %1362 = vadd.xlane.f32.xlu0 %v1361
    %v1363 = vpop.xlane.xlu0 %1362
    %v1364 = vsel %vm371, %v1322, 0.0
    %1365 = vadd.xlane.f32.xlu0 %v1364
    %v1366 = vpop.xlane.xlu0 %1365
    %v1367 = vsel %vm371, %v1323, 0.0
    %1368 = vadd.xlane.f32.xlu0 %v1367
    %v1369 = vpop.xlane.xlu0 %1368
    %v1370 = vsel %vm371, %v1324, 0.0
    %1371 = vadd.xlane.f32.xlu0 %v1370
    %v1372 = vpop.xlane.xlu0 %1371
    %v1373 = vmax.f32 %v1327, 1e-24
    %v1374 = vmax.f32 %v1330, 1e-24
    %v1375 = vmax.f32 %v1333, 1e-24
    %v1376 = vmax.f32 %v1336, 1e-24
    %v1377 = vmax.f32 %v1339, 1e-24
    %v1378 = vmax.f32 %v1342, 1e-24
    %v1379 = vmax.f32 %v1345, 1e-24
    %v1380 = vmax.f32 %v1348, 1e-24
    %v1381 = vmax.f32 %v1351, 1e-24
    %v1382 = vmax.f32 %v1354, 1e-24
    %v1383 = vmax.f32 %v1357, 1e-24
    %v1384 = vmax.f32 %v1360, 1e-24
    %v1385 = vmax.f32 %v1363, 1e-24
    %v1386 = vmax.f32 %v1366, 1e-24
    %v1387 = vmax.f32 %v1369, 1e-24
    %v1388 = vmax.f32 %v1372, 1e-24
    %v1389 = vrsqrt.pop %v1373
    %v1390 = vrsqrt.pop %v1374
    %v1391 = vrsqrt.pop %v1375
    %v1392 = vrsqrt.pop %v1376
    %v1393 = vrsqrt.pop %v1377
    %v1394 = vrsqrt.pop %v1378
    %v1395 = vrsqrt.pop %v1379
    %v1396 = vrsqrt.pop %v1380
    %v1397 = vrsqrt.pop %v1381
    %v1398 = vrsqrt.pop %v1382
    %v1399 = vrsqrt.pop %v1383
    %v1400 = vrsqrt.pop %v1384
    %v1401 = vrsqrt.pop %v1385
    %v1402 = vrsqrt.pop %v1386
    %v1403 = vrsqrt.pop %v1387
    %v1404 = vrsqrt.pop %v1388
    %v1405 = vmul.f32 %v909, %v1389
    %v1406 = vmul.f32 %v910, %v1390
    %v1407 = vmul.f32 %v911, %v1391
    %v1408 = vmul.f32 %v912, %v1392
    %v1409 = vmul.f32 %v913, %v1393
    %v1410 = vmul.f32 %v914, %v1394
    %v1411 = vmul.f32 %v915, %v1395
    %v1412 = vmul.f32 %v916, %v1396
    %v1413 = vmul.f32 %v917, %v1397
    %v1414 = vmul.f32 %v918, %v1398
    %v1415 = vmul.f32 %v919, %v1399
    %v1416 = vmul.f32 %v920, %v1400
    %v1417 = vmul.f32 %v921, %v1401
    %v1418 = vmul.f32 %v922, %v1402
    %v1419 = vmul.f32 %v923, %v1403
    %v1420 = vmul.f32 %v924, %v1404
    %v1421 = vsel %vm371, %v1405, 0.0
    %v1422 = vsel %vm371, %v1406, 0.0
    %v1423 = vsel %vm371, %v1407, 0.0
    %v1424 = vsel %vm371, %v1408, 0.0
    %v1425 = vsel %vm371, %v1409, 0.0
    %v1426 = vsel %vm371, %v1410, 0.0
    %v1427 = vsel %vm371, %v1411, 0.0
    %v1428 = vsel %vm371, %v1412, 0.0
    %v1429 = vsel %vm371, %v1413, 0.0
    %v1430 = vsel %vm371, %v1414, 0.0
    %v1431 = vsel %vm371, %v1415, 0.0
    %v1432 = vsel %vm371, %v1416, 0.0
    %v1433 = vsel %vm371, %v1417, 0.0
    %v1434 = vsel %vm371, %v1418, 0.0
    %v1435 = vsel %vm371, %v1419, 0.0
    %v1436 = vsel %vm371, %v1420, 0.0
    %1437 = vst [vmem:[#allocation11] sm:$0xff] %v1421
    %1438 = vst [vmem:[#allocation11 + $0x8] sm:$0xff] %v1422
    %1439 = vst [vmem:[#allocation11 + $0x10] sm:$0xff] %v1423
    %1440 = vst [vmem:[#allocation11 + $0x18] sm:$0xff] %v1424
    %1441 = vst [vmem:[#allocation11 + $0x20] sm:$0xff] %v1425
    %1442 = vst [vmem:[#allocation11 + $0x28] sm:$0xff] %v1426
    %1443 = vst [vmem:[#allocation11 + $0x30] sm:$0xff] %v1427
    %1444 = vst [vmem:[#allocation11 + $0x38] sm:$0xff] %v1428
    %1445 = vst [vmem:[#allocation11 + $0x40] sm:$0xff] %v1429
    %1446 = vst [vmem:[#allocation11 + $0x48] sm:$0xff] %v1430
    %1447 = vst [vmem:[#allocation11 + $0x50] sm:$0xff] %v1431
    %1448 = vst [vmem:[#allocation11 + $0x58] sm:$0xff] %v1432
    %1449 = vst [vmem:[#allocation11 + $0x60] sm:$0xff] %v1433
    %1450 = vst [vmem:[#allocation11 + $0x68] sm:$0xff] %v1434
    %1451 = vst [vmem:[#allocation11 + $0x70] sm:$0xff] %v1435
    %1452 = vst [vmem:[#allocation11 + $0x78] sm:$0xff] %v1436
    // Predicated region
    $region84: #{tpu_custom_call.1} parent=1 // pred_check
      _
    $region85: #{tpu_custom_call.1} parent=1 // pred_check_branch
      %1454 = sbr.rel (0) target = $region87
    $region86: #{tpu_custom_call.1} parent=1 // pred_region
      %s1456 = ssub.s32 2048, 2048
      %1457 = vsyncadd [#allocation6], %s1456
      %s1458 = sshll.u32 [#allocation11], 4
      %s1459 = int_to_ptr.vmem [resolvable:$true] %s1458
      %1464 = dma.vmem_to_hbm [thread:$0]  %s1459, 2048, %s10, [#allocation6], 128, 128, 8
    $region87: #{tpu_custom_call.1} parent=1 // pred_fallthru
      _
    // Predicated region
    $region88: #{tpu_custom_call.1} parent=1 // pred_check
      _
    $region89: #{tpu_custom_call.1} parent=1 // pred_check_branch
      %1466 = sbr.rel (0) target = $region91
    $region90: #{tpu_custom_call.1} parent=1 // pred_region
      %s1468 = ssub.s32 2048, 2048
      %1469 = vsyncadd [#allocation13], %s1468
      %s1470 = sshll.u32 [#allocation12], 4
      %s1471 = int_to_ptr.vmem [resolvable:$true] %s1470
      %1476 = dma.vmem_to_hbm [thread:$0]  %s1471, 2048, %s11, [#allocation13], 128, 128, 8
    $region91: #{tpu_custom_call.1} parent=1 // pred_fallthru
      _
    // Predicated region
    $region92: #{tpu_custom_call.1} parent=1 // pred_check
      _
    $region93: #{tpu_custom_call.1} parent=1 // pred_check_branch
      %1478 = sbr.rel (0) target = $region95
    $region94: #{tpu_custom_call.1} parent=1 // pred_region
      %1479 = dma.done [#allocation6], 2048
    $region95: #{tpu_custom_call.1} parent=1 // pred_fallthru
      _
    // Predicated region
    $region96: #{tpu_custom_call.1} parent=1 // pred_check
      _
    $region97: #{tpu_custom_call.1} parent=1 // pred_check_branch
      %1481 = sbr.rel (0) target = $region99
    $region98: #{tpu_custom_call.1} parent=1 // pred_region
      %1482 = dma.done [#allocation13], 2048
    $region99: #{tpu_custom_call.1} parent=1 // pred_fallthru
      _
    %1483 = vsyncpa [#allocation5], 1
    %1484 = vsyncpa [#allocation6], 1
    %1485 = vsyncpa [#allocation13], 1
    %1486 = vsyncpa [#allocation7], 1
    %1487 = vsyncpa [#allocation10], 1
  %1488 = vsyncmov [#allocation3]
  %s1489 = vpop.sfrf %1488
  %p1490 = scmp.eq.s32.totalorder %s1489, 0
  %p1491 = pneg %p1490
  %1493 = shalt.err (%p1491)

</llo_original>
